<compile_context>
chip_gen: v6e
topology: v6e:2x2x1
jax: 0.10.0
libtpu: 0.0.40
codegen_flags: <defaults>
</compile_context>

<pallas_src>
import functools

import jax
import jax.numpy as jnp
from jax.experimental import pallas as pl
from jax.experimental.pallas import tpu as pltpu

H1 = 1024
H2 = 512


def _round_up(n, m):
    return ((n + m - 1) // m) * m


def _pick_block_b(B):
    """Batch tile: small tiles for tiny batches, >=2 fat tiles otherwise (v7x megacore)."""
    if B < 128:
        return max(16, _round_up(B, 16))
    return min(512, _round_up(pl.cdiv(B, 2), 128))


# ----------------------------------------------------------------------------- kernel
def _mlp_kernel(x_ref, w1_ref, c1_ref, w2_ref, c2_ref, w3_ref, b3_ref, o_ref):
    # cast activations to bf16 inside the kernel (keeps the wrapper pre-pass away)
    x = x_ref[...].astype(jnp.bfloat16)

    # fc1 (+ folded BN1 affine + bias) + relu; dropout (eval) = identity
    h = jnp.dot(x, w1_ref[...], preferred_element_type=jnp.float32)
    h = jnp.maximum(h + c1_ref[...], 0.0).astype(jnp.bfloat16)

    # fc2 (+ folded BN2 affine + bias) + relu; dropout (eval) = identity
    h = jnp.dot(h, w2_ref[...], preferred_element_type=jnp.float32)
    h = jnp.maximum(h + c2_ref[...], 0.0).astype(jnp.bfloat16)

    # fc3
    o = jnp.dot(h, w3_ref[...], preferred_element_type=jnp.float32) + b3_ref[...]
    o_ref[...] = o.astype(o_ref.dtype)


# ----------------------------------------------------------------------------- wrapper
def prepare_params(params):
    """Fold eval-mode BN + bias into the linears; weights bf16, biases f32.
    No K-padding: the kernel blocks the full input_dim directly."""
    # (x @ W + b) * s + t == x @ (W * s) + (b * s + t)
    w1 = params["w1"] * params["s1"]
    c1 = params["b1"] * params["s1"] + params["t1"]
    w2 = params["w2"] * params["s2"]
    c2 = params["b2"] * params["s2"] + params["t2"]
    w3, b3 = params["w3"], params["b3"]

    return dict(
        w1=w1.astype(jnp.bfloat16), c1=c1.astype(jnp.float32),
        w2=w2.astype(jnp.bfloat16), c2=c2.astype(jnp.float32),
        w3=w3.astype(jnp.bfloat16), b3=b3.astype(jnp.float32),
    )


@functools.partial(jax.jit, static_argnames=("block_b", "out_dtype"))
def complex_vector_model(x, prep, *, block_b=None, out_dtype=jnp.float32):
    """x: (B, input_dim) f32.  prep: output of prepare_params().
    block_b: batch tile (None = auto: adaptive tiny-batch / 512-cap fat tiles).
    out_dtype: pass jnp.bfloat16 to halve output HBM traffic (v6e/v5e win)."""
    B, D = x.shape
    out_dim = prep["w3"].shape[1]

    if block_b is None:
        block_b = _pick_block_b(B)
    b_pad = _round_up(B, block_b)

    # cheap batch-only pad (no dtype change, no K pad); zero rows are row-independent
    xp = x if b_pad == B else jnp.pad(x, ((0, b_pad - B), (0, 0)))

    full = lambda arr: pl.BlockSpec(arr.shape, lambda i: (0, 0))
    in_specs = [
        pl.BlockSpec((block_b, D), lambda i: (i, 0)),   # x, tiled over batch only
        full(prep["w1"]), full(prep["c1"]),
        full(prep["w2"]), full(prep["c2"]),
        full(prep["w3"]), full(prep["b3"]),
    ]
    out_spec = pl.BlockSpec((block_b, out_dim), lambda i: (i, 0))

    out = pl.pallas_call(
        _mlp_kernel,
        out_shape=jax.ShapeDtypeStruct((b_pad, out_dim), out_dtype),
        grid_spec=pltpu.PrefetchScalarGridSpec(
            num_scalar_prefetch=0,
            grid=(b_pad // block_b,),
            in_specs=in_specs,
            out_specs=out_spec,
        ),
        compiler_params=pltpu.CompilerParams(
            dimension_semantics=("parallel",),   # batch tiles shard across TCs (v7x)
            vmem_limit_bytes=32 << 20,           # ~10 MiB working set at block_b=512
        ),
    )(xp, prep["w1"], prep["c1"], prep["w2"], prep["c2"], prep["w3"], prep["b3"])
    return out[:B]


# ----------------------------------------------------------------------------- params / reference
def init_params(key, input_dim, output_dim=512):
    """Deterministic synthetic parameters matching the PyTorch module's shapes (f32)."""
    ks = jax.random.split(key, 12)
    f32 = jnp.float32

    def linear(kw, kb, fan_in, fan_out):
        lim = 1.0 / jnp.sqrt(fan_in)
        w = jax.random.uniform(kw, (fan_in, fan_out), f32, -lim, lim)  # (in, out) = W^T
        b = jax.random.uniform(kb, (1, fan_out), f32, -lim, lim)
        return w, b

    w1, b1 = linear(ks[0], ks[1], input_dim, H1)
    w2, b2 = linear(ks[2], ks[3], H1, H2)
    w3, b3 = linear(ks[4], ks[5], H2, output_dim)

    eps = 1e-5

    def bn_fold(kg, kb, km, kv, n):
        gamma = 1.0 + 0.1 * jax.random.normal(kg, (1, n), f32)
        beta = 0.1 * jax.random.normal(kb, (1, n), f32)
        rmean = 0.05 * jax.random.normal(km, (1, n), f32)
        rvar = 1.0 + 0.1 * jax.random.uniform(kv, (1, n), f32)
        scale = gamma / jnp.sqrt(rvar + eps)
        shift = beta - rmean * scale
        return scale, shift

    s1, t1 = bn_fold(ks[6], ks[7], ks[8], ks[9], H1)
    s2, t2 = bn_fold(ks[10], ks[11], ks[6], ks[7], H2)

    return dict(w1=w1, b1=b1, s1=s1, t1=t1,
                w2=w2, b2=b2, s2=s2, t2=t2,
                w3=w3, b3=b3)


def reference(x, p):
    """Pure-JAX f32 reference (eval-mode module)."""
    h = jnp.maximum((x @ p["w1"] + p["b1"]) * p["s1"] + p["t1"], 0.0)
    h = jnp.maximum((h @ p["w2"] + p["b2"]) * p["s2"] + p["t2"], 0.0)
    return h @ p["w3"] + p["b3"]


# ----------------------------------------------------------------------------- test
if __name__ == "__main__":
    key = jax.random.PRNGKey(0)
    k_x, k_p, k_x2 = jax.random.split(key, 3)

    batch, input_dim, output_dim = 8, 32, 512
    params = init_params(k_p, input_dim, output_dim)
    prep = prepare_params(params)

    # tiny-batch check: adaptive block_b=16, single small tile (no 128-row padding waste)
    x = jax.random.normal(k_x, (batch, input_dim), jnp.float32)
    out = jax.block_until_ready(complex_vector_model(x, prep))
    ref = reference(x, params)
    assert out.shape == (batch, output_dim)
    rel = jnp.max(jnp.abs(out - ref)) / (jnp.max(jnp.abs(ref)) + 1e-6)
    assert rel < 5e-2, f"mismatch vs reference (bf16 rel err {rel})"

    # multi-tile check: B=192 -> block_b=128, b_pad=256, grid of 2 tiles
    # (exercises the batch pad, the pipeline, and 2-TC sharding on v7x)
    x2 = jax.random.normal(k_x2, (192, input_dim), jnp.float32)
    out2 = jax.block_until_ready(complex_vector_model(x2, prep))
    ref2 = reference(x2, params)
    assert out2.shape == (192, output_dim)
    rel2 = jnp.max(jnp.abs(out2 - ref2)) / (jnp.max(jnp.abs(ref2)) + 1e-6)
    assert rel2 < 5e-2, f"mismatch vs reference (bf16 rel err {rel2})"

    print("KERNEL_OK")
</pallas_src>

<mosaic_0001>
module attributes {stable_mosaic.version = 11 : i64} {
  func.func @_mlp_kernel(%arg0: i32, %arg1: memref<16x32xf32, #tpu.memory_space<vmem>>, %arg2: memref<32x1024xbf16, #tpu.memory_space<vmem>>, %arg3: memref<1x1024xf32, #tpu.memory_space<vmem>>, %arg4: memref<1024x512xbf16, #tpu.memory_space<vmem>>, %arg5: memref<1x512xf32, #tpu.memory_space<vmem>>, %arg6: memref<512x512xbf16, #tpu.memory_space<vmem>>, %arg7: memref<1x512xf32, #tpu.memory_space<vmem>>, %arg8: memref<16x512xf32, #tpu.memory_space<vmem>>) attributes {dimension_semantics = [#tpu.dimension_semantics<parallel>], iteration_bounds = array<i64: 1>, scalar_prefetch = 0 : i64, scratch_operands = 0 : i64, tpu.core_type = #tpu.core_type<tc>, window_params = [{transform_indices = @transform_0, window_bounds = array<i64: 16, 32>}, {pipeline_mode = #tpu.pipeline_mode<synchronous>, transform_indices = @transform_1, window_bounds = array<i64: 32, 1024>}, {pipeline_mode = #tpu.pipeline_mode<synchronous>, transform_indices = @transform_2, window_bounds = array<i64: 1, 1024>}, {pipeline_mode = #tpu.pipeline_mode<synchronous>, transform_indices = @transform_3, window_bounds = array<i64: 1024, 512>}, {pipeline_mode = #tpu.pipeline_mode<synchronous>, transform_indices = @transform_4, window_bounds = array<i64: 1, 512>}, {pipeline_mode = #tpu.pipeline_mode<synchronous>, transform_indices = @transform_5, window_bounds = array<i64: 512, 512>}, {pipeline_mode = #tpu.pipeline_mode<synchronous>, transform_indices = @transform_6, window_bounds = array<i64: 1, 512>}, {transform_indices = @transform_7, window_bounds = array<i64: 16, 512>}]} {
    %c0 = arith.constant 0 : index
    %c0_0 = arith.constant 0 : index
    %0 = vector.load %arg1[%c0, %c0_0] : memref<16x32xf32, #tpu.memory_space<vmem>>, vector<16x32xf32>
    %1 = arith.truncf %0 : vector<16x32xf32> to vector<16x32xbf16>
    %c0_1 = arith.constant 0 : index
    %c0_2 = arith.constant 0 : index
    %2 = vector.load %arg2[%c0_1, %c0_2] : memref<32x1024xbf16, #tpu.memory_space<vmem>>, vector<32x1024xbf16>
    %cst = arith.constant dense<0.000000e+00> : vector<16x1024xf32>
    %3 = tpu.matmul %1, %2, %cst {dimension_numbers = #tpu.dot_dimension_numbers<[1], [0], [0], [1], [0, 0, 1, 1], [], []>} : vector<16x32xbf16>, vector<32x1024xbf16>, vector<16x1024xf32> -> vector<16x1024xf32>
    %c0_3 = arith.constant 0 : index
    %c0_4 = arith.constant 0 : index
    %4 = vector.load %arg3[%c0_3, %c0_4] : memref<1x1024xf32, #tpu.memory_space<vmem>>, vector<1x1024xf32>
    %5 = vector.broadcast %4 : vector<1x1024xf32> to vector<16x1024xf32>
    %6 = arith.addf %3, %5 : vector<16x1024xf32>
    %cst_5 = arith.constant 0.000000e+00 : f32
    %7 = vector.broadcast %cst_5 : f32 to vector<16x1024xf32>
    %8 = arith.maximumf %6, %7 : vector<16x1024xf32>
    %9 = arith.truncf %8 : vector<16x1024xf32> to vector<16x1024xbf16>
    %c0_6 = arith.constant 0 : index
    %c0_7 = arith.constant 0 : index
    %10 = vector.load %arg4[%c0_6, %c0_7] : memref<1024x512xbf16, #tpu.memory_space<vmem>>, vector<1024x512xbf16>
    %cst_8 = arith.constant dense<0.000000e+00> : vector<16x512xf32>
    %11 = tpu.matmul %9, %10, %cst_8 {dimension_numbers = #tpu.dot_dimension_numbers<[1], [0], [0], [1], [0, 0, 1, 1], [], []>} : vector<16x1024xbf16>, vector<1024x512xbf16>, vector<16x512xf32> -> vector<16x512xf32>
    %c0_9 = arith.constant 0 : index
    %c0_10 = arith.constant 0 : index
    %12 = vector.load %arg5[%c0_9, %c0_10] : memref<1x512xf32, #tpu.memory_space<vmem>>, vector<1x512xf32>
    %13 = vector.broadcast %12 : vector<1x512xf32> to vector<16x512xf32>
    %14 = arith.addf %11, %13 : vector<16x512xf32>
    %cst_11 = arith.constant 0.000000e+00 : f32
    %15 = vector.broadcast %cst_11 : f32 to vector<16x512xf32>
    %16 = arith.maximumf %14, %15 : vector<16x512xf32>
    %17 = arith.truncf %16 : vector<16x512xf32> to vector<16x512xbf16>
    %c0_12 = arith.constant 0 : index
    %c0_13 = arith.constant 0 : index
    %18 = vector.load %arg6[%c0_12, %c0_13] : memref<512x512xbf16, #tpu.memory_space<vmem>>, vector<512x512xbf16>
    %cst_14 = arith.constant dense<0.000000e+00> : vector<16x512xf32>
    %19 = tpu.matmul %17, %18, %cst_14 {dimension_numbers = #tpu.dot_dimension_numbers<[1], [0], [0], [1], [0, 0, 1, 1], [], []>} : vector<16x512xbf16>, vector<512x512xbf16>, vector<16x512xf32> -> vector<16x512xf32>
    %c0_15 = arith.constant 0 : index
    %c0_16 = arith.constant 0 : index
    %20 = vector.load %arg7[%c0_15, %c0_16] : memref<1x512xf32, #tpu.memory_space<vmem>>, vector<1x512xf32>
    %21 = vector.broadcast %20 : vector<1x512xf32> to vector<16x512xf32>
    %22 = arith.addf %19, %21 : vector<16x512xf32>
    %c0_17 = arith.constant 0 : index
    %c0_18 = arith.constant 0 : index
    %23 = vector.load %arg8[%c0_17, %c0_18] : memref<16x512xf32, #tpu.memory_space<vmem>>, vector<16x512xf32>
    tpu.vector_store %arg8[%c0_17, %c0_18], %22 {strides = array<i32>} : memref<16x512xf32, #tpu.memory_space<vmem>>, vector<16x512xf32>,
    return
  }
  func.func @transform_0(%arg0: i32) -> (i32, i32) {
    %c0_i32 = arith.constant 0 : i32
    %c0_i32_0 = arith.constant 0 : i32
    return %arg0, %c0_i32 : i32, i32
  }
  func.func @transform_1(%arg0: i32) -> (i32, i32) {
    %c0_i32 = arith.constant 0 : i32
    %c0_i32_0 = arith.constant 0 : i32
    %c0_i32_1 = arith.constant 0 : i32
    return %c0_i32, %c0_i32_0 : i32, i32
  }
  func.func @transform_2(%arg0: i32) -> (i32, i32) {
    %c0_i32 = arith.constant 0 : i32
    %c0_i32_0 = arith.constant 0 : i32
    %c0_i32_1 = arith.constant 0 : i32
    return %c0_i32, %c0_i32_0 : i32, i32
  }
  func.func @transform_3(%arg0: i32) -> (i32, i32) {
    %c0_i32 = arith.constant 0 : i32
    %c0_i32_0 = arith.constant 0 : i32
    %c0_i32_1 = arith.constant 0 : i32
    return %c0_i32, %c0_i32_0 : i32, i32
  }
  func.func @transform_4(%arg0: i32) -> (i32, i32) {
    %c0_i32 = arith.constant 0 : i32
    %c0_i32_0 = arith.constant 0 : i32
    %c0_i32_1 = arith.constant 0 : i32
    return %c0_i32, %c0_i32_0 : i32, i32
  }
  func.func @transform_5(%arg0: i32) -> (i32, i32) {
    %c0_i32 = arith.constant 0 : i32
    %c0_i32_0 = arith.constant 0 : i32
    %c0_i32_1 = arith.constant 0 : i32
    return %c0_i32, %c0_i32_0 : i32, i32
  }
  func.func @transform_6(%arg0: i32) -> (i32, i32) {
    %c0_i32 = arith.constant 0 : i32
    %c0_i32_0 = arith.constant 0 : i32
    %c0_i32_1 = arith.constant 0 : i32
    return %c0_i32, %c0_i32_0 : i32, i32
  }
  func.func @transform_7(%arg0: i32) -> (i32, i32) {
    %c0_i32 = arith.constant 0 : i32
    %c0_i32_0 = arith.constant 0 : i32
    return %arg0, %c0_i32 : i32, i32
  }
}

</mosaic_0001>

<llo_original>
// kernel: complex_vector_model.1
$region0: #{complex_vector_model.1}
  #allocation0 [shape = 'u32[]', space=smem, size = 0x4, offset = 0x4, fixed_abs, tag = 'smem constant byte address 0x4 - core index']
  #allocation1 [shape = 'u32[144,128]{1,0:T(1,128)}', space=vmem, size = 0x12000, scoped, tag = 'internal scratch']
  %s0 = inlined_call_operand.vmem [shape: f32[16,32], index: 0, kind: input, shape index: {}]
  %s1 = inlined_call_operand.hbm [shape: bf16[32,1024], index: 1, kind: input, shape index: {}]
  %s2 = inlined_call_operand.vmem [shape: f32[1,1024], index: 2, kind: input, shape index: {}]
  %s3 = inlined_call_operand.hbm [shape: bf16[1024,512], index: 3, kind: input, shape index: {}]
  %s4 = inlined_call_operand.vmem [shape: f32[1,512], index: 4, kind: input, shape index: {}]
  %s5 = inlined_call_operand.hbm [shape: bf16[512,512], index: 5, kind: input, shape index: {}]
  %s6 = inlined_call_operand.vmem [shape: f32[1,512], index: 6, kind: input, shape index: {}]
  %s7 = inlined_call_operand.vmem [shape: f32[16,512], index: 7, kind: output, shape index: {}]
  %s8 = sld [smem:[#allocation0]]
  $region50: #{complex_vector_model.1} parent=0
    _
  %s10 = ssub.s32 1, %s8
  %s11 = scalar_select 0, %s10, %s8
  $region1: #{complex_vector_model.1} parent=0
    #allocation2 [shape = 'u8[65536]{0}', space=vmem, size = 0x10000, scoped, tag = 'input window, operand 1, single buffered']
    #allocation3 [shape = 's32[1]{0}', space=sflag, size = 0x4, scoped, tag = 'scoped memory for complex_vector_model.1']
    #allocation4 [shape = 'u8[1048576]{0}', space=vmem, size = 0x100000, scoped, tag = 'input window, operand 3, single buffered']
    #allocation5 [shape = 's32[1]{0}', space=sflag, size = 0x4, scoped, tag = 'scoped memory for complex_vector_model.1']
    #allocation6 [shape = 'u8[524288]{0}', space=vmem, size = 0x80000, scoped, tag = 'input window, operand 5, single buffered']
    %12 = vsyncpa [#allocation3], 0
    %13 = vsyncpa [#allocation5], 0
    // Predicated region
    $region2: #{complex_vector_model.1} parent=1 // pred_check
      _
    $region3: #{complex_vector_model.1} parent=1 // pred_check_branch
      %15 = sbr.rel (0) target = $region5
    $region4: #{complex_vector_model.1} parent=1 // pred_region
      _
    $region5: #{complex_vector_model.1} parent=1 // pred_fallthru
      _
    // Predicated region
    $region6: #{complex_vector_model.1} parent=1 // pred_check
      _
    $region7: #{complex_vector_model.1} parent=1 // pred_check_branch
      %17 = sbr.rel (0) target = $region9
    $region8: #{complex_vector_model.1} parent=1 // pred_region
      %s19 = ssub.s32 2048, 2048
      %20 = vsyncadd [#allocation3], %s19
      %s21 = sshll.u32 [#allocation2], 4
      %s22 = int_to_ptr.vmem [resolvable:$true] %s21
      %27 = dma.hbm_to_vmem [thread:$0]  %s1, 2048, %s22, [#allocation3], 512, 512, 32
    $region9: #{complex_vector_model.1} parent=1 // pred_fallthru
      _
    // Predicated region
    $region10: #{complex_vector_model.1} parent=1 // pred_check
      _
    $region11: #{complex_vector_model.1} parent=1 // pred_check_branch
      %29 = sbr.rel (0) target = $region13
    $region12: #{complex_vector_model.1} parent=1 // pred_region
      _
    $region13: #{complex_vector_model.1} parent=1 // pred_fallthru
      _
    // Predicated region
    $region14: #{complex_vector_model.1} parent=1 // pred_check
      _
    $region15: #{complex_vector_model.1} parent=1 // pred_check_branch
      %31 = sbr.rel (0) target = $region17
    $region16: #{complex_vector_model.1} parent=1 // pred_region
      %s33 = ssub.s32 32768, 32768
      %34 = vsyncadd [#allocation5], %s33
      %s35 = sshll.u32 [#allocation4], 4
      %s36 = int_to_ptr.vmem [resolvable:$true] %s35
      %41 = dma.hbm_to_vmem [thread:$0]  %s3, 32768, %s36, [#allocation5], 256, 256, 16
    $region17: #{complex_vector_model.1} parent=1 // pred_fallthru
      _
    // Predicated region
    $region18: #{complex_vector_model.1} parent=1 // pred_check
      _
    $region19: #{complex_vector_model.1} parent=1 // pred_check_branch
      %43 = sbr.rel (0) target = $region21
    $region20: #{complex_vector_model.1} parent=1 // pred_region
      _
    $region21: #{complex_vector_model.1} parent=1 // pred_fallthru
      _
    // Predicated region
    $region22: #{complex_vector_model.1} parent=1 // pred_check
      _
    $region23: #{complex_vector_model.1} parent=1 // pred_check_branch
      %45 = sbr.rel (0) target = $region25
    $region24: #{complex_vector_model.1} parent=1 // pred_region
      %s47 = ssub.s32 16384, 16384
      %48 = vsyncadd [#allocation5], %s47
      %s49 = sshll.u32 [#allocation6], 4
      %s50 = int_to_ptr.vmem [resolvable:$true] %s49
      %55 = dma.hbm_to_vmem [thread:$0]  %s5, 16384, %s50, [#allocation5], 256, 256, 16
    $region25: #{complex_vector_model.1} parent=1 // pred_fallthru
      _
    // Predicated region
    $region26: #{complex_vector_model.1} parent=1 // pred_check
      _
    $region27: #{complex_vector_model.1} parent=1 // pred_check_branch
      %57 = sbr.rel (0) target = $region29
    $region28: #{complex_vector_model.1} parent=1 // pred_region
      _
    $region29: #{complex_vector_model.1} parent=1 // pred_fallthru
      _
    // Predicated region
    $region30: #{complex_vector_model.1} parent=1 // pred_check
      _
    $region31: #{complex_vector_model.1} parent=1 // pred_check_branch
      %59 = sbr.rel (0) target = $region33
    $region32: #{complex_vector_model.1} parent=1 // pred_region
      %60 = dma.done [#allocation3], 2048
    $region33: #{complex_vector_model.1} parent=1 // pred_fallthru
      _
    // Predicated region
    $region34: #{complex_vector_model.1} parent=1 // pred_check
      _
    $region35: #{complex_vector_model.1} parent=1 // pred_check_branch
      %62 = sbr.rel (0) target = $region37
    $region36: #{complex_vector_model.1} parent=1 // pred_region
      %63 = dma.done [#allocation5], 32768
    $region37: #{complex_vector_model.1} parent=1 // pred_fallthru
      _
    // Predicated region
    $region38: #{complex_vector_model.1} parent=1 // pred_check
      _
    $region39: #{complex_vector_model.1} parent=1 // pred_check_branch
      %65 = sbr.rel (0) target = $region41
    $region40: #{complex_vector_model.1} parent=1 // pred_region
      %66 = dma.done [#allocation5], 16384
    $region41: #{complex_vector_model.1} parent=1 // pred_fallthru
      _
    %v68 = vld [vmem:[%s0] sm:$0xff]
    %v69 = vld [vmem:[%s0 + $0x8] sm:$0xff]
    %v70 = vpack.c.bf16 %v69, %v68
    %v71 = vld [vmem:[#allocation2] sm:$0xff]
    %v72 = vld [vmem:[#allocation2 + $0x8] sm:$0xff]
    %v73 = vld [vmem:[#allocation2 + $0x10] sm:$0xff]
    %v74 = vld [vmem:[#allocation2 + $0x18] sm:$0xff]
    %v75 = vld [vmem:[#allocation2 + $0x20] sm:$0xff]
    %v76 = vld [vmem:[#allocation2 + $0x28] sm:$0xff]
    %v77 = vld [vmem:[#allocation2 + $0x30] sm:$0xff]
    %v78 = vld [vmem:[#allocation2 + $0x38] sm:$0xff]
    %v79 = vld [vmem:[#allocation2 + $0x40] sm:$0xff]
    %v80 = vld [vmem:[#allocation2 + $0x48] sm:$0xff]
    %v81 = vld [vmem:[#allocation2 + $0x50] sm:$0xff]
    %v82 = vld [vmem:[#allocation2 + $0x58] sm:$0xff]
    %v83 = vld [vmem:[#allocation2 + $0x60] sm:$0xff]
    %v84 = vld [vmem:[#allocation2 + $0x68] sm:$0xff]
    %v85 = vld [vmem:[#allocation2 + $0x70] sm:$0xff]
    %v86 = vld [vmem:[#allocation2 + $0x78] sm:$0xff]
    %v87 = vld [vmem:[%s2] sm:$0xff]
    %v89 = vlaneseq
    %v90 = vshrl.u32 %v89, 7
    %v91 = vsub.s32 0, %v90
    %v92 = vrot.slane %v87, %v91
    %v93 = vlaneseq
    %v94 = vshrl.u32 %v93, 7
    %v95 = vsub.s32 1, %v94
    %v96 = vrot.slane %v87, %v95
    %v97 = vlaneseq
    %v98 = vshrl.u32 %v97, 7
    %v99 = vsub.s32 2, %v98
    %v100 = vrot.slane %v87, %v99
    %v101 = vlaneseq
    %v102 = vshrl.u32 %v101, 7
    %v103 = vsub.s32 3, %v102
    %v104 = vrot.slane %v87, %v103
    %v105 = vlaneseq
    %v106 = vshrl.u32 %v105, 7
    %v107 = vsub.s32 4, %v106
    %v108 = vrot.slane %v87, %v107
    %v109 = vlaneseq
    %v110 = vshrl.u32 %v109, 7
    %v111 = vsub.s32 5, %v110
    %v112 = vrot.slane %v87, %v111
    %v113 = vlaneseq
    %v114 = vshrl.u32 %v113, 7
    %v115 = vsub.s32 6, %v114
    %v116 = vrot.slane %v87, %v115
    %v117 = vlaneseq
    %v118 = vshrl.u32 %v117, 7
    %v119 = vsub.s32 7, %v118
    %v120 = vrot.slane %v87, %v119
    %v145 = vunpack.c.l.b16 %v71
    %v146 = vunpack.c.h.b16 %v71
    %v147 = vunpack.c.l.b16 %v72
    %v148 = vunpack.c.h.b16 %v72
    %v149 = vunpack.c.l.b16 %v73
    %v150 = vunpack.c.h.b16 %v73
    %v151 = vunpack.c.l.b16 %v74
    %v152 = vunpack.c.h.b16 %v74
    %v153 = vunpack.c.l.b16 %v75
    %v154 = vunpack.c.h.b16 %v75
    %v155 = vunpack.c.l.b16 %v76
    %v156 = vunpack.c.h.b16 %v76
    %v157 = vunpack.c.l.b16 %v77
    %v158 = vunpack.c.h.b16 %v77
    %v159 = vunpack.c.l.b16 %v78
    %v160 = vunpack.c.h.b16 %v78
    %v161 = vunpack.c.l.b16 %v79
    %v162 = vunpack.c.h.b16 %v79
    %v163 = vunpack.c.l.b16 %v80
    %v164 = vunpack.c.h.b16 %v80
    %v165 = vunpack.c.l.b16 %v81
    %v166 = vunpack.c.h.b16 %v81
    %v167 = vunpack.c.l.b16 %v82
    %v168 = vunpack.c.h.b16 %v82
    %v169 = vunpack.c.l.b16 %v83
    %v170 = vunpack.c.h.b16 %v83
    %v171 = vunpack.c.l.b16 %v84
    %v172 = vunpack.c.h.b16 %v84
    %v173 = vunpack.c.l.b16 %v85
    %v174 = vunpack.c.h.b16 %v85
    %v175 = vunpack.c.l.b16 %v86
    %v176 = vunpack.c.h.b16 %v86
    %v177 = vpack.c.b16 %v153, %v145
    %v178 = vpack.c.b16 %v154, %v146
    %v179 = vpack.c.b16 %v155, %v147
    %v180 = vpack.c.b16 %v156, %v148
    %v181 = vpack.c.b16 %v157, %v149
    %v182 = vpack.c.b16 %v158, %v150
    %v183 = vpack.c.b16 %v159, %v151
    %v184 = vpack.c.b16 %v160, %v152
    %v185 = vpack.c.b16 %v169, %v161
    %v186 = vpack.c.b16 %v170, %v162
    %v187 = vpack.c.b16 %v171, %v163
    %v188 = vpack.c.b16 %v172, %v164
    %v189 = vpack.c.b16 %v173, %v165
    %v190 = vpack.c.b16 %v174, %v166
    %v191 = vpack.c.b16 %v175, %v167
    %v192 = vpack.c.b16 %v176, %v168
    %vm209 = vcmask 261120
    %v211 = vsel %vm209, %v70, 0
    %213 = vmatprep.subr.bf16.mxu0 0
    %214 = vmatpush1.bf16.msra.mxu0 0
    %215 = vmatprep.subr.bf16.mxu0 0
    %216 = vmatpush1.bf16.msra.mxu0 0
    %217 = vmatprep.subr.bf16.mxu0 0
    %218 = vmatpush1.bf16.msra.mxu0 0
    %219 = vmatprep.subr.bf16.mxu0 0
    %220 = vmatpush1.bf16.msra.mxu0 0
    %221 = vmatprep.subr.bf16.mxu0 0
    %222 = vmatpush1.bf16.msra.mxu0 0
    %223 = vmatprep.subr.bf16.mxu0 0
    %224 = vmatpush1.bf16.msra.mxu0 0
    %225 = vmatprep.subr.bf16.mxu0 %v186
    %226 = vmatpush1.bf16.msra.mxu0 %v185
    %227 = vmatprep.subr.bf16.mxu0 %v178
    %228 = vmatpush1.bf16.msra.mxu0 %v177
    %229 = vmatprep.subr.bf16.mxu0 0
    %230 = vmatpush2.bf16.msra.mxu0 0
    %231 = vmatprep.subr.bf16.mxu0 0
    %232 = vmatpush2.bf16.msra.mxu0 0
    %233 = vmatprep.subr.bf16.mxu0 0
    %234 = vmatpush2.bf16.msra.mxu0 0
    %235 = vmatprep.subr.bf16.mxu0 0
    %236 = vmatpush2.bf16.msra.mxu0 0
    %237 = vmatprep.subr.bf16.mxu0 0
    %238 = vmatpush2.bf16.msra.mxu0 0
    %239 = vmatprep.subr.bf16.mxu0 0
    %240 = vmatpush2.bf16.msra.mxu0 0
    %241 = vmatprep.subr.bf16.mxu0 0
    %242 = vmatpush2.bf16.msra.mxu0 0
    %243 = vmatprep.subr.bf16.mxu0 0
    %244 = vmatpush2.bf16.msra.mxu0 0
    %245 = vmatprep.mubr.bf16.mxu0 0
    %246 = vmatmul.mubr.bf16.gmra.mxu0 %v211
    %v247 = vpop.f32.mrf.mxu0
    %v248 = vadd.f32 %v92, %v247
    %v249 = vpop.f32.mrf.mxu0
    %v250 = vadd.f32 %v96, %v249
    %v251 = vpop.f32.mrf.mxu0
    %v252 = vadd.f32 %v92, %v251
    %v253 = vpop.f32.mrf.mxu0
    %v254 = vadd.f32 %v96, %v253
    %255 = vdwg.mxu0
    %256 = vmatprep.subr.bf16.mxu0 0
    %257 = vmatpush1.bf16.msra.mxu0 0
    %258 = vmatprep.subr.bf16.mxu0 0
    %259 = vmatpush1.bf16.msra.mxu0 0
    %260 = vmatprep.subr.bf16.mxu0 0
    %261 = vmatpush1.bf16.msra.mxu0 0
    %262 = vmatprep.subr.bf16.mxu0 0
    %263 = vmatpush1.bf16.msra.mxu0 0
    %264 = vmatprep.subr.bf16.mxu0 0
    %265 = vmatpush1.bf16.msra.mxu0 0
    %266 = vmatprep.subr.bf16.mxu0 0
    %267 = vmatpush1.bf16.msra.mxu0 0
    %268 = vmatprep.subr.bf16.mxu0 %v188
    %269 = vmatpush1.bf16.msra.mxu0 %v187
    %270 = vmatprep.subr.bf16.mxu0 %v180
    %271 = vmatpush1.bf16.msra.mxu0 %v179
    %272 = vmatprep.subr.bf16.mxu0 0
    %273 = vmatpush2.bf16.msra.mxu0 0
    %274 = vmatprep.subr.bf16.mxu0 0
    %275 = vmatpush2.bf16.msra.mxu0 0
    %276 = vmatprep.subr.bf16.mxu0 0
    %277 = vmatpush2.bf16.msra.mxu0 0
    %278 = vmatprep.subr.bf16.mxu0 0
    %279 = vmatpush2.bf16.msra.mxu0 0
    %280 = vmatprep.subr.bf16.mxu0 0
    %281 = vmatpush2.bf16.msra.mxu0 0
    %282 = vmatprep.subr.bf16.mxu0 0
    %283 = vmatpush2.bf16.msra.mxu0 0
    %284 = vmatprep.subr.bf16.mxu0 0
    %285 = vmatpush2.bf16.msra.mxu0 0
    %286 = vmatprep.subr.bf16.mxu0 0
    %287 = vmatpush2.bf16.msra.mxu0 0
    %288 = vmatprep.mubr.bf16.mxu0 0
    %289 = vmatmul.mubr.bf16.gmra.mxu0 %v211
    %v290 = vpop.f32.mrf.mxu0
    %v291 = vadd.f32 %v100, %v290
    %v292 = vpop.f32.mrf.mxu0
    %v293 = vadd.f32 %v104, %v292
    %v294 = vpop.f32.mrf.mxu0
    %v295 = vadd.f32 %v100, %v294
    %v296 = vpop.f32.mrf.mxu0
    %v297 = vadd.f32 %v104, %v296
    %298 = vdwg.mxu0
    %299 = vmatprep.subr.bf16.mxu0 0
    %300 = vmatpush1.bf16.msra.mxu0 0
    %301 = vmatprep.subr.bf16.mxu0 0
    %302 = vmatpush1.bf16.msra.mxu0 0
    %303 = vmatprep.subr.bf16.mxu0 0
    %304 = vmatpush1.bf16.msra.mxu0 0
    %305 = vmatprep.subr.bf16.mxu0 0
    %306 = vmatpush1.bf16.msra.mxu0 0
    %307 = vmatprep.subr.bf16.mxu0 0
    %308 = vmatpush1.bf16.msra.mxu0 0
    %309 = vmatprep.subr.bf16.mxu0 0
    %310 = vmatpush1.bf16.msra.mxu0 0
    %311 = vmatprep.subr.bf16.mxu0 %v190
    %312 = vmatpush1.bf16.msra.mxu0 %v189
    %313 = vmatprep.subr.bf16.mxu0 %v182
    %314 = vmatpush1.bf16.msra.mxu0 %v181
    %315 = vmatprep.subr.bf16.mxu0 0
    %316 = vmatpush2.bf16.msra.mxu0 0
    %317 = vmatprep.subr.bf16.mxu0 0
    %318 = vmatpush2.bf16.msra.mxu0 0
    %319 = vmatprep.subr.bf16.mxu0 0
    %320 = vmatpush2.bf16.msra.mxu0 0
    %321 = vmatprep.subr.bf16.mxu0 0
    %322 = vmatpush2.bf16.msra.mxu0 0
    %323 = vmatprep.subr.bf16.mxu0 0
    %324 = vmatpush2.bf16.msra.mxu0 0
    %325 = vmatprep.subr.bf16.mxu0 0
    %326 = vmatpush2.bf16.msra.mxu0 0
    %327 = vmatprep.subr.bf16.mxu0 0
    %328 = vmatpush2.bf16.msra.mxu0 0
    %329 = vmatprep.subr.bf16.mxu0 0
    %330 = vmatpush2.bf16.msra.mxu0 0
    %331 = vmatprep.mubr.bf16.mxu0 0
    %332 = vmatmul.mubr.bf16.gmra.mxu0 %v211
    %v333 = vpop.f32.mrf.mxu0
    %v334 = vadd.f32 %v108, %v333
    %v335 = vpop.f32.mrf.mxu0
    %v336 = vadd.f32 %v112, %v335
    %v337 = vpop.f32.mrf.mxu0
    %v338 = vadd.f32 %v108, %v337
    %v339 = vpop.f32.mrf.mxu0
    %v340 = vadd.f32 %v112, %v339
    %341 = vdwg.mxu0
    %342 = vmatprep.subr.bf16.mxu0 0
    %343 = vmatpush1.bf16.msra.mxu0 0
    %344 = vmatprep.subr.bf16.mxu0 0
    %345 = vmatpush1.bf16.msra.mxu0 0
    %346 = vmatprep.subr.bf16.mxu0 0
    %347 = vmatpush1.bf16.msra.mxu0 0
    %348 = vmatprep.subr.bf16.mxu0 0
    %349 = vmatpush1.bf16.msra.mxu0 0
    %350 = vmatprep.subr.bf16.mxu0 0
    %351 = vmatpush1.bf16.msra.mxu0 0
    %352 = vmatprep.subr.bf16.mxu0 0
    %353 = vmatpush1.bf16.msra.mxu0 0
    %354 = vmatprep.subr.bf16.mxu0 %v192
    %355 = vmatpush1.bf16.msra.mxu0 %v191
    %356 = vmatprep.subr.bf16.mxu0 %v184
    %357 = vmatpush1.bf16.msra.mxu0 %v183
    %358 = vmatprep.subr.bf16.mxu0 0
    %359 = vmatpush2.bf16.msra.mxu0 0
    %360 = vmatprep.subr.bf16.mxu0 0
    %361 = vmatpush2.bf16.msra.mxu0 0
    %362 = vmatprep.subr.bf16.mxu0 0
    %363 = vmatpush2.bf16.msra.mxu0 0
    %364 = vmatprep.subr.bf16.mxu0 0
    %365 = vmatpush2.bf16.msra.mxu0 0
    %366 = vmatprep.subr.bf16.mxu0 0
    %367 = vmatpush2.bf16.msra.mxu0 0
    %368 = vmatprep.subr.bf16.mxu0 0
    %369 = vmatpush2.bf16.msra.mxu0 0
    %370 = vmatprep.subr.bf16.mxu0 0
    %371 = vmatpush2.bf16.msra.mxu0 0
    %372 = vmatprep.subr.bf16.mxu0 0
    %373 = vmatpush2.bf16.msra.mxu0 0
    %374 = vmatprep.mubr.bf16.mxu0 0
    %375 = vmatmul.mubr.bf16.gmra.mxu0 %v211
    %v376 = vpop.f32.mrf.mxu0
    %v377 = vadd.f32 %v116, %v376
    %v378 = vpop.f32.mrf.mxu0
    %v379 = vadd.f32 %v120, %v378
    %v380 = vpop.f32.mrf.mxu0
    %v381 = vadd.f32 %v116, %v380
    %v382 = vpop.f32.mrf.mxu0
    %v383 = vadd.f32 %v120, %v382
    %384 = vdwg.mxu0
    %v385 = vmax.f32 %v248, 0.0
    %v386 = vmax.f32 %v250, 0.0
    %v387 = vmax.f32 %v291, 0.0
    %v388 = vmax.f32 %v293, 0.0
    %v389 = vmax.f32 %v334, 0.0
    %v390 = vmax.f32 %v336, 0.0
    %v391 = vmax.f32 %v377, 0.0
    %v392 = vmax.f32 %v379, 0.0
    %v393 = vmax.f32 %v252, 0.0
    %v394 = vmax.f32 %v254, 0.0
    %v395 = vmax.f32 %v295, 0.0
    %v396 = vmax.f32 %v297, 0.0
    %v397 = vmax.f32 %v338, 0.0
    %v398 = vmax.f32 %v340, 0.0
    %v399 = vmax.f32 %v381, 0.0
    %v400 = vmax.f32 %v383, 0.0
    %v401 = vpack.c.bf16 %v393, %v385
    %v402 = vpack.c.bf16 %v394, %v386
    %v403 = vpack.c.bf16 %v395, %v387
    %v404 = vpack.c.bf16 %v396, %v388
    %v405 = vpack.c.bf16 %v397, %v389
    %v406 = vpack.c.bf16 %v398, %v390
    %v407 = vpack.c.bf16 %v399, %v391
    %v408 = vpack.c.bf16 %v400, %v392
    %v409 = vld [vmem:[#allocation4] sm:$0xff]
    %v410 = vld [vmem:[#allocation4 + $0x8] sm:$0xff]
    %v411 = vld [vmem:[#allocation4 + $0x10] sm:$0xff]
    %v412 = vld [vmem:[#allocation4 + $0x18] sm:$0xff]
    %v413 = vld [vmem:[#allocation4 + $0x20] sm:$0xff]
    %v414 = vld [vmem:[#allocation4 + $0x28] sm:$0xff]
    %v415 = vld [vmem:[#allocation4 + $0x30] sm:$0xff]
    %v416 = vld [vmem:[#allocation4 + $0x38] sm:$0xff]
    %v417 = vld [vmem:[#allocation4 + $0x40] sm:$0xff]
    %v418 = vld [vmem:[#allocation4 + $0x48] sm:$0xff]
    %v419 = vld [vmem:[#allocation4 + $0x50] sm:$0xff]
    %v420 = vld [vmem:[#allocation4 + $0x58] sm:$0xff]
    %v421 = vld [vmem:[#allocation4 + $0x60] sm:$0xff]
    %v422 = vld [vmem:[#allocation4 + $0x68] sm:$0xff]
    %v423 = vld [vmem:[#allocation4 + $0x70] sm:$0xff]
    %v424 = vld [vmem:[#allocation4 + $0x78] sm:$0xff]
    %v425 = vld [vmem:[#allocation4 + $0x80] sm:$0xff]
    %v426 = vld [vmem:[#allocation4 + $0x88] sm:$0xff]
    %v427 = vld [vmem:[#allocation4 + $0x90] sm:$0xff]
    %v428 = vld [vmem:[#allocation4 + $0x98] sm:$0xff]
    %v429 = vld [vmem:[#allocation4 + $0xa0] sm:$0xff]
    %v430 = vld [vmem:[#allocation4 + $0xa8] sm:$0xff]
    %v431 = vld [vmem:[#allocation4 + $0xb0] sm:$0xff]
    %v432 = vld [vmem:[#allocation4 + $0xb8] sm:$0xff]
    %v433 = vld [vmem:[#allocation4 + $0xc0] sm:$0xff]
    %v434 = vld [vmem:[#allocation4 + $0xc8] sm:$0xff]
    %v435 = vld [vmem:[#allocation4 + $0xd0] sm:$0xff]
    %v436 = vld [vmem:[#allocation4 + $0xd8] sm:$0xff]
    %v437 = vld [vmem:[#allocation4 + $0xe0] sm:$0xff]
    %v438 = vld [vmem:[#allocation4 + $0xe8] sm:$0xff]
    %v439 = vld [vmem:[#allocation4 + $0xf0] sm:$0xff]
    %v440 = vld [vmem:[#allocation4 + $0xf8] sm:$0xff]
    %v441 = vld [vmem:[#allocation4 + $0x100] sm:$0xff]
    %v442 = vld [vmem:[#allocation4 + $0x108] sm:$0xff]
    %v443 = vld [vmem:[#allocation4 + $0x110] sm:$0xff]
    %v444 = vld [vmem:[#allocation4 + $0x118] sm:$0xff]
    %v445 = vld [vmem:[#allocation4 + $0x120] sm:$0xff]
    %v446 = vld [vmem:[#allocation4 + $0x128] sm:$0xff]
    %v447 = vld [vmem:[#allocation4 + $0x130] sm:$0xff]
    %v448 = vld [vmem:[#allocation4 + $0x138] sm:$0xff]
    %v449 = vld [vmem:[#allocation4 + $0x140] sm:$0xff]
    %v450 = vld [vmem:[#allocation4 + $0x148] sm:$0xff]
    %v451 = vld [vmem:[#allocation4 + $0x150] sm:$0xff]
    %v452 = vld [vmem:[#allocation4 + $0x158] sm:$0xff]
    %v453 = vld [vmem:[#allocation4 + $0x160] sm:$0xff]
    %v454 = vld [vmem:[#allocation4 + $0x168] sm:$0xff]
    %v455 = vld [vmem:[#allocation4 + $0x170] sm:$0xff]
    %v456 = vld [vmem:[#allocation4 + $0x178] sm:$0xff]
    %v457 = vld [vmem:[#allocation4 + $0x180] sm:$0xff]
    %v458 = vld [vmem:[#allocation4 + $0x188] sm:$0xff]
    %v459 = vld [vmem:[#allocation4 + $0x190] sm:$0xff]
    %v460 = vld [vmem:[#allocation4 + $0x198] sm:$0xff]
    %v461 = vld [vmem:[#allocation4 + $0x1a0] sm:$0xff]
    %v462 = vld [vmem:[#allocation4 + $0x1a8] sm:$0xff]
    %v463 = vld [vmem:[#allocation4 + $0x1b0] sm:$0xff]
    %v464 = vld [vmem:[#allocation4 + $0x1b8] sm:$0xff]
    %v465 = vld [vmem:[#allocation4 + $0x1c0] sm:$0xff]
    %v466 = vld [vmem:[#allocation4 + $0x1c8] sm:$0xff]
    %v467 = vld [vmem:[#allocation4 + $0x1d0] sm:$0xff]
    %v468 = vld [vmem:[#allocation4 + $0x1d8] sm:$0xff]
    %v469 = vld [vmem:[#allocation4 + $0x1e0] sm:$0xff]
    %v470 = vld [vmem:[#allocation4 + $0x1e8] sm:$0xff]
    %v471 = vld [vmem:[#allocation4 + $0x1f0] sm:$0xff]
    %v472 = vld [vmem:[#allocation4 + $0x1f8] sm:$0xff]
    %v473 = vld [vmem:[#allocation4 + $0x200] sm:$0xff]
    %v474 = vld [vmem:[#allocation4 + $0x208] sm:$0xff]
    %v475 = vld [vmem:[#allocation4 + $0x210] sm:$0xff]
    %v476 = vld [vmem:[#allocation4 + $0x218] sm:$0xff]
    %v477 = vld [vmem:[#allocation4 + $0x220] sm:$0xff]
    %v478 = vld [vmem:[#allocation4 + $0x228] sm:$0xff]
    %v479 = vld [vmem:[#allocation4 + $0x230] sm:$0xff]
    %v480 = vld [vmem:[#allocation4 + $0x238] sm:$0xff]
    %v481 = vld [vmem:[#allocation4 + $0x240] sm:$0xff]
    %v482 = vld [vmem:[#allocation4 + $0x248] sm:$0xff]
    %v483 = vld [vmem:[#allocation4 + $0x250] sm:$0xff]
    %v484 = vld [vmem:[#allocation4 + $0x258] sm:$0xff]
    %v485 = vld [vmem:[#allocation4 + $0x260] sm:$0xff]
    %v486 = vld [vmem:[#allocation4 + $0x268] sm:$0xff]
    %v487 = vld [vmem:[#allocation4 + $0x270] sm:$0xff]
    %v488 = vld [vmem:[#allocation4 + $0x278] sm:$0xff]
    %v489 = vld [vmem:[#allocation4 + $0x280] sm:$0xff]
    %v490 = vld [vmem:[#allocation4 + $0x288] sm:$0xff]
    %v491 = vld [vmem:[#allocation4 + $0x290] sm:$0xff]
    %v492 = vld [vmem:[#allocation4 + $0x298] sm:$0xff]
    %v493 = vld [vmem:[#allocation4 + $0x2a0] sm:$0xff]
    %v494 = vld [vmem:[#allocation4 + $0x2a8] sm:$0xff]
    %v495 = vld [vmem:[#allocation4 + $0x2b0] sm:$0xff]
    %v496 = vld [vmem:[#allocation4 + $0x2b8] sm:$0xff]
    %v497 = vld [vmem:[#allocation4 + $0x2c0] sm:$0xff]
    %v498 = vld [vmem:[#allocation4 + $0x2c8] sm:$0xff]
    %v499 = vld [vmem:[#allocation4 + $0x2d0] sm:$0xff]
    %v500 = vld [vmem:[#allocation4 + $0x2d8] sm:$0xff]
    %v501 = vld [vmem:[#allocation4 + $0x2e0] sm:$0xff]
    %v502 = vld [vmem:[#allocation4 + $0x2e8] sm:$0xff]
    %v503 = vld [vmem:[#allocation4 + $0x2f0] sm:$0xff]
    %v504 = vld [vmem:[#allocation4 + $0x2f8] sm:$0xff]
    %v505 = vld [vmem:[#allocation4 + $0x300] sm:$0xff]
    %v506 = vld [vmem:[#allocation4 + $0x308] sm:$0xff]
    %v507 = vld [vmem:[#allocation4 + $0x310] sm:$0xff]
    %v508 = vld [vmem:[#allocation4 + $0x318] sm:$0xff]
    %v509 = vld [vmem:[#allocation4 + $0x320] sm:$0xff]
    %v510 = vld [vmem:[#allocation4 + $0x328] sm:$0xff]
    %v511 = vld [vmem:[#allocation4 + $0x330] sm:$0xff]
    %v512 = vld [vmem:[#allocation4 + $0x338] sm:$0xff]
    %v513 = vld [vmem:[#allocation4 + $0x340] sm:$0xff]
    %v514 = vld [vmem:[#allocation4 + $0x348] sm:$0xff]
    %v515 = vld [vmem:[#allocation4 + $0x350] sm:$0xff]
    %v516 = vld [vmem:[#allocation4 + $0x358] sm:$0xff]
    %v517 = vld [vmem:[#allocation4 + $0x360] sm:$0xff]
    %v518 = vld [vmem:[#allocation4 + $0x368] sm:$0xff]
    %v519 = vld [vmem:[#allocation4 + $0x370] sm:$0xff]
    %v520 = vld [vmem:[#allocation4 + $0x378] sm:$0xff]
    %v521 = vld [vmem:[#allocation4 + $0x380] sm:$0xff]
    %v522 = vld [vmem:[#allocation4 + $0x388] sm:$0xff]
    %v523 = vld [vmem:[#allocation4 + $0x390] sm:$0xff]
    %v524 = vld [vmem:[#allocation4 + $0x398] sm:$0xff]
    %v525 = vld [vmem:[#allocation4 + $0x3a0] sm:$0xff]
    %v526 = vld [vmem:[#allocation4 + $0x3a8] sm:$0xff]
    %v527 = vld [vmem:[#allocation4 + $0x3b0] sm:$0xff]
    %v528 = vld [vmem:[#allocation4 + $0x3b8] sm:$0xff]
    %v529 = vld [vmem:[#allocation4 + $0x3c0] sm:$0xff]
    %v530 = vld [vmem:[#allocation4 + $0x3c8] sm:$0xff]
    %v531 = vld [vmem:[#allocation4 + $0x3d0] sm:$0xff]
    %v532 = vld [vmem:[#allocation4 + $0x3d8] sm:$0xff]
    %v533 = vld [vmem:[#allocation4 + $0x3e0] sm:$0xff]
    %v534 = vld [vmem:[#allocation4 + $0x3e8] sm:$0xff]
    %v535 = vld [vmem:[#allocation4 + $0x3f0] sm:$0xff]
    %v536 = vld [vmem:[#allocation4 + $0x3f8] sm:$0xff]
    %v537 = vld [vmem:[#allocation4 + $0x400] sm:$0xff]
    %v538 = vld [vmem:[#allocation4 + $0x408] sm:$0xff]
    %v539 = vld [vmem:[#allocation4 + $0x410] sm:$0xff]
    %v540 = vld [vmem:[#allocation4 + $0x418] sm:$0xff]
    %v541 = vld [vmem:[#allocation4 + $0x420] sm:$0xff]
    %v542 = vld [vmem:[#allocation4 + $0x428] sm:$0xff]
    %v543 = vld [vmem:[#allocation4 + $0x430] sm:$0xff]
    %v544 = vld [vmem:[#allocation4 + $0x438] sm:$0xff]
    %v545 = vld [vmem:[#allocation4 + $0x440] sm:$0xff]
    %v546 = vld [vmem:[#allocation4 + $0x448] sm:$0xff]
    %v547 = vld [vmem:[#allocation4 + $0x450] sm:$0xff]
    %v548 = vld [vmem:[#allocation4 + $0x458] sm:$0xff]
    %v549 = vld [vmem:[#allocation4 + $0x460] sm:$0xff]
    %v550 = vld [vmem:[#allocation4 + $0x468] sm:$0xff]
    %v551 = vld [vmem:[#allocation4 + $0x470] sm:$0xff]
    %v552 = vld [vmem:[#allocation4 + $0x478] sm:$0xff]
    %v553 = vld [vmem:[#allocation4 + $0x480] sm:$0xff]
    %v554 = vld [vmem:[#allocation4 + $0x488] sm:$0xff]
    %v555 = vld [vmem:[#allocation4 + $0x490] sm:$0xff]
    %v556 = vld [vmem:[#allocation4 + $0x498] sm:$0xff]
    %v557 = vld [vmem:[#allocation4 + $0x4a0] sm:$0xff]
    %v558 = vld [vmem:[#allocation4 + $0x4a8] sm:$0xff]
    %v559 = vld [vmem:[#allocation4 + $0x4b0] sm:$0xff]
    %v560 = vld [vmem:[#allocation4 + $0x4b8] sm:$0xff]
    %v561 = vld [vmem:[#allocation4 + $0x4c0] sm:$0xff]
    %v562 = vld [vmem:[#allocation4 + $0x4c8] sm:$0xff]
    %v563 = vld [vmem:[#allocation4 + $0x4d0] sm:$0xff]
    %v564 = vld [vmem:[#allocation4 + $0x4d8] sm:$0xff]
    %v565 = vld [vmem:[#allocation4 + $0x4e0] sm:$0xff]
    %v566 = vld [vmem:[#allocation4 + $0x4e8] sm:$0xff]
    %v567 = vld [vmem:[#allocation4 + $0x4f0] sm:$0xff]
    %v568 = vld [vmem:[#allocation4 + $0x4f8] sm:$0xff]
    %v569 = vld [vmem:[#allocation4 + $0x500] sm:$0xff]
    %v570 = vld [vmem:[#allocation4 + $0x508] sm:$0xff]
    %v571 = vld [vmem:[#allocation4 + $0x510] sm:$0xff]
    %v572 = vld [vmem:[#allocation4 + $0x518] sm:$0xff]
    %v573 = vld [vmem:[#allocation4 + $0x520] sm:$0xff]
    %v574 = vld [vmem:[#allocation4 + $0x528] sm:$0xff]
    %v575 = vld [vmem:[#allocation4 + $0x530] sm:$0xff]
    %v576 = vld [vmem:[#allocation4 + $0x538] sm:$0xff]
    %v577 = vld [vmem:[#allocation4 + $0x540] sm:$0xff]
    %v578 = vld [vmem:[#allocation4 + $0x548] sm:$0xff]
    %v579 = vld [vmem:[#allocation4 + $0x550] sm:$0xff]
    %v580 = vld [vmem:[#allocation4 + $0x558] sm:$0xff]
    %v581 = vld [vmem:[#allocation4 + $0x560] sm:$0xff]
    %v582 = vld [vmem:[#allocation4 + $0x568] sm:$0xff]
    %v583 = vld [vmem:[#allocation4 + $0x570] sm:$0xff]
    %v584 = vld [vmem:[#allocation4 + $0x578] sm:$0xff]
    %v585 = vld [vmem:[#allocation4 + $0x580] sm:$0xff]
    %v586 = vld [vmem:[#allocation4 + $0x588] sm:$0xff]
    %v587 = vld [vmem:[#allocation4 + $0x590] sm:$0xff]
    %v588 = vld [vmem:[#allocation4 + $0x598] sm:$0xff]
    %v589 = vld [vmem:[#allocation4 + $0x5a0] sm:$0xff]
    %v590 = vld [vmem:[#allocation4 + $0x5a8] sm:$0xff]
    %v591 = vld [vmem:[#allocation4 + $0x5b0] sm:$0xff]
    %v592 = vld [vmem:[#allocation4 + $0x5b8] sm:$0xff]
    %v593 = vld [vmem:[#allocation4 + $0x5c0] sm:$0xff]
    %v594 = vld [vmem:[#allocation4 + $0x5c8] sm:$0xff]
    %v595 = vld [vmem:[#allocation4 + $0x5d0] sm:$0xff]
    %v596 = vld [vmem:[#allocation4 + $0x5d8] sm:$0xff]
    %v597 = vld [vmem:[#allocation4 + $0x5e0] sm:$0xff]
    %v598 = vld [vmem:[#allocation4 + $0x5e8] sm:$0xff]
    %v599 = vld [vmem:[#allocation4 + $0x5f0] sm:$0xff]
    %v600 = vld [vmem:[#allocation4 + $0x5f8] sm:$0xff]
    %v601 = vld [vmem:[#allocation4 + $0x600] sm:$0xff]
    %v602 = vld [vmem:[#allocation4 + $0x608] sm:$0xff]
    %v603 = vld [vmem:[#allocation4 + $0x610] sm:$0xff]
    %v604 = vld [vmem:[#allocation4 + $0x618] sm:$0xff]
    %v605 = vld [vmem:[#allocation4 + $0x620] sm:$0xff]
    %v606 = vld [vmem:[#allocation4 + $0x628] sm:$0xff]
    %v607 = vld [vmem:[#allocation4 + $0x630] sm:$0xff]
    %v608 = vld [vmem:[#allocation4 + $0x638] sm:$0xff]
    %v609 = vld [vmem:[#allocation4 + $0x640] sm:$0xff]
    %v610 = vld [vmem:[#allocation4 + $0x648] sm:$0xff]
    %v611 = vld [vmem:[#allocation4 + $0x650] sm:$0xff]
    %v612 = vld [vmem:[#allocation4 + $0x658] sm:$0xff]
    %v613 = vld [vmem:[#allocation4 + $0x660] sm:$0xff]
    %v614 = vld [vmem:[#allocation4 + $0x668] sm:$0xff]
    %v615 = vld [vmem:[#allocation4 + $0x670] sm:$0xff]
    %v616 = vld [vmem:[#allocation4 + $0x678] sm:$0xff]
    %v617 = vld [vmem:[#allocation4 + $0x680] sm:$0xff]
    %v618 = vld [vmem:[#allocation4 + $0x688] sm:$0xff]
    %v619 = vld [vmem:[#allocation4 + $0x690] sm:$0xff]
    %v620 = vld [vmem:[#allocation4 + $0x698] sm:$0xff]
    %v621 = vld [vmem:[#allocation4 + $0x6a0] sm:$0xff]
    %v622 = vld [vmem:[#allocation4 + $0x6a8] sm:$0xff]
    %v623 = vld [vmem:[#allocation4 + $0x6b0] sm:$0xff]
    %v624 = vld [vmem:[#allocation4 + $0x6b8] sm:$0xff]
    %v625 = vld [vmem:[#allocation4 + $0x6c0] sm:$0xff]
    %v626 = vld [vmem:[#allocation4 + $0x6c8] sm:$0xff]
    %v627 = vld [vmem:[#allocation4 + $0x6d0] sm:$0xff]
    %v628 = vld [vmem:[#allocation4 + $0x6d8] sm:$0xff]
    %v629 = vld [vmem:[#allocation4 + $0x6e0] sm:$0xff]
    %v630 = vld [vmem:[#allocation4 + $0x6e8] sm:$0xff]
    %v631 = vld [vmem:[#allocation4 + $0x6f0] sm:$0xff]
    %v632 = vld [vmem:[#allocation4 + $0x6f8] sm:$0xff]
    %v633 = vld [vmem:[#allocation4 + $0x700] sm:$0xff]
    %v634 = vld [vmem:[#allocation4 + $0x708] sm:$0xff]
    %v635 = vld [vmem:[#allocation4 + $0x710] sm:$0xff]
    %v636 = vld [vmem:[#allocation4 + $0x718] sm:$0xff]
    %v637 = vld [vmem:[#allocation4 + $0x720] sm:$0xff]
    %v638 = vld [vmem:[#allocation4 + $0x728] sm:$0xff]
    %v639 = vld [vmem:[#allocation4 + $0x730] sm:$0xff]
    %v640 = vld [vmem:[#allocation4 + $0x738] sm:$0xff]
    %v641 = vld [vmem:[#allocation4 + $0x740] sm:$0xff]
    %v642 = vld [vmem:[#allocation4 + $0x748] sm:$0xff]
    %v643 = vld [vmem:[#allocation4 + $0x750] sm:$0xff]
    %v644 = vld [vmem:[#allocation4 + $0x758] sm:$0xff]
    %v645 = vld [vmem:[#allocation4 + $0x760] sm:$0xff]
    %v646 = vld [vmem:[#allocation4 + $0x768] sm:$0xff]
    %v647 = vld [vmem:[#allocation4 + $0x770] sm:$0xff]
    %v648 = vld [vmem:[#allocation4 + $0x778] sm:$0xff]
    %v649 = vld [vmem:[#allocation4 + $0x780] sm:$0xff]
    %v650 = vld [vmem:[#allocation4 + $0x788] sm:$0xff]
    %v651 = vld [vmem:[#allocation4 + $0x790] sm:$0xff]
    %v652 = vld [vmem:[#allocation4 + $0x798] sm:$0xff]
    %v653 = vld [vmem:[#allocation4 + $0x7a0] sm:$0xff]
    %v654 = vld [vmem:[#allocation4 + $0x7a8] sm:$0xff]
    %v655 = vld [vmem:[#allocation4 + $0x7b0] sm:$0xff]
    %v656 = vld [vmem:[#allocation4 + $0x7b8] sm:$0xff]
    %v657 = vld [vmem:[#allocation4 + $0x7c0] sm:$0xff]
    %v658 = vld [vmem:[#allocation4 + $0x7c8] sm:$0xff]
    %v659 = vld [vmem:[#allocation4 + $0x7d0] sm:$0xff]
    %v660 = vld [vmem:[#allocation4 + $0x7d8] sm:$0xff]
    %v661 = vld [vmem:[#allocation4 + $0x7e0] sm:$0xff]
    %v662 = vld [vmem:[#allocation4 + $0x7e8] sm:$0xff]
    %v663 = vld [vmem:[#allocation4 + $0x7f0] sm:$0xff]
    %v664 = vld [vmem:[#allocation4 + $0x7f8] sm:$0xff]
    %v665 = vld [vmem:[%s4] sm:$0xf]
    %v667 = vlaneseq
    %v668 = vshrl.u32 %v667, 7
    %v669 = vsub.s32 0, %v668
    %v670 = vrot.slane %v665, %v669
    %v671 = vlaneseq
    %v672 = vshrl.u32 %v671, 7
    %v673 = vsub.s32 1, %v672
    %v674 = vrot.slane %v665, %v673
    %v675 = vlaneseq
    %v676 = vshrl.u32 %v675, 7
    %v677 = vsub.s32 2, %v676
    %v678 = vrot.slane %v665, %v677
    %v679 = vlaneseq
    %v680 = vshrl.u32 %v679, 7
    %v681 = vsub.s32 3, %v680
    %v682 = vrot.slane %v665, %v681
    %v943 = vunpack.c.l.b16 %v409
    %v944 = vunpack.c.h.b16 %v409
    %v945 = vunpack.c.l.b16 %v410
    %v946 = vunpack.c.h.b16 %v410
    %v947 = vunpack.c.l.b16 %v411
    %v948 = vunpack.c.h.b16 %v411
    %v949 = vunpack.c.l.b16 %v412
    %v950 = vunpack.c.h.b16 %v412
    %v951 = vunpack.c.l.b16 %v413
    %v952 = vunpack.c.h.b16 %v413
    %v953 = vunpack.c.l.b16 %v414
    %v954 = vunpack.c.h.b16 %v414
    %v955 = vunpack.c.l.b16 %v415
    %v956 = vunpack.c.h.b16 %v415
    %v957 = vunpack.c.l.b16 %v416
    %v958 = vunpack.c.h.b16 %v416
    %v959 = vunpack.c.l.b16 %v417
    %v960 = vunpack.c.h.b16 %v417
    %v961 = vunpack.c.l.b16 %v418
    %v962 = vunpack.c.h.b16 %v418
    %v963 = vunpack.c.l.b16 %v419
    %v964 = vunpack.c.h.b16 %v419
    %v965 = vunpack.c.l.b16 %v420
    %v966 = vunpack.c.h.b16 %v420
    %v967 = vunpack.c.l.b16 %v421
    %v968 = vunpack.c.h.b16 %v421
    %v969 = vunpack.c.l.b16 %v422
    %v970 = vunpack.c.h.b16 %v422
    %v971 = vunpack.c.l.b16 %v423
    %v972 = vunpack.c.h.b16 %v423
    %v973 = vunpack.c.l.b16 %v424
    %v974 = vunpack.c.h.b16 %v424
    %v975 = vunpack.c.l.b16 %v425
    %v976 = vunpack.c.h.b16 %v425
    %v977 = vunpack.c.l.b16 %v426
    %v978 = vunpack.c.h.b16 %v426
    %v979 = vunpack.c.l.b16 %v427
    %v980 = vunpack.c.h.b16 %v427
    %v981 = vunpack.c.l.b16 %v428
    %v982 = vunpack.c.h.b16 %v428
    %v983 = vunpack.c.l.b16 %v429
    %v984 = vunpack.c.h.b16 %v429
    %v985 = vunpack.c.l.b16 %v430
    %v986 = vunpack.c.h.b16 %v430
    %v987 = vunpack.c.l.b16 %v431
    %v988 = vunpack.c.h.b16 %v431
    %v989 = vunpack.c.l.b16 %v432
    %v990 = vunpack.c.h.b16 %v432
    %v991 = vunpack.c.l.b16 %v433
    %v992 = vunpack.c.h.b16 %v433
    %v993 = vunpack.c.l.b16 %v434
    %v994 = vunpack.c.h.b16 %v434
    %v995 = vunpack.c.l.b16 %v435
    %v996 = vunpack.c.h.b16 %v435
    %v997 = vunpack.c.l.b16 %v436
    %v998 = vunpack.c.h.b16 %v436
    %v999 = vunpack.c.l.b16 %v437
    %v1000 = vunpack.c.h.b16 %v437
    %v1001 = vunpack.c.l.b16 %v438
    %v1002 = vunpack.c.h.b16 %v438
    %v1003 = vunpack.c.l.b16 %v439
    %v1004 = vunpack.c.h.b16 %v439
    %v1005 = vunpack.c.l.b16 %v440
    %v1006 = vunpack.c.h.b16 %v440
    %v1007 = vunpack.c.l.b16 %v441
    %v1008 = vunpack.c.h.b16 %v441
    %v1009 = vunpack.c.l.b16 %v442
    %v1010 = vunpack.c.h.b16 %v442
    %v1011 = vunpack.c.l.b16 %v443
    %v1012 = vunpack.c.h.b16 %v443
    %v1013 = vunpack.c.l.b16 %v444
    %v1014 = vunpack.c.h.b16 %v444
    %v1015 = vunpack.c.l.b16 %v445
    %v1016 = vunpack.c.h.b16 %v445
    %v1017 = vunpack.c.l.b16 %v446
    %v1018 = vunpack.c.h.b16 %v446
    %v1019 = vunpack.c.l.b16 %v447
    %v1020 = vunpack.c.h.b16 %v447
    %v1021 = vunpack.c.l.b16 %v448
    %v1022 = vunpack.c.h.b16 %v448
    %v1023 = vunpack.c.l.b16 %v449
    %v1024 = vunpack.c.h.b16 %v449
    %v1025 = vunpack.c.l.b16 %v450
    %v1026 = vunpack.c.h.b16 %v450
    %v1027 = vunpack.c.l.b16 %v451
    %v1028 = vunpack.c.h.b16 %v451
    %v1029 = vunpack.c.l.b16 %v452
    %v1030 = vunpack.c.h.b16 %v452
    %v1031 = vunpack.c.l.b16 %v453
    %v1032 = vunpack.c.h.b16 %v453
    %v1033 = vunpack.c.l.b16 %v454
    %v1034 = vunpack.c.h.b16 %v454
    %v1035 = vunpack.c.l.b16 %v455
    %v1036 = vunpack.c.h.b16 %v455
    %v1037 = vunpack.c.l.b16 %v456
    %v1038 = vunpack.c.h.b16 %v456
    %v1039 = vunpack.c.l.b16 %v457
    %v1040 = vunpack.c.h.b16 %v457
    %v1041 = vunpack.c.l.b16 %v458
    %v1042 = vunpack.c.h.b16 %v458
    %v1043 = vunpack.c.l.b16 %v459
    %v1044 = vunpack.c.h.b16 %v459
    %v1045 = vunpack.c.l.b16 %v460
    %v1046 = vunpack.c.h.b16 %v460
    %v1047 = vunpack.c.l.b16 %v461
    %v1048 = vunpack.c.h.b16 %v461
    %v1049 = vunpack.c.l.b16 %v462
    %v1050 = vunpack.c.h.b16 %v462
    %v1051 = vunpack.c.l.b16 %v463
    %v1052 = vunpack.c.h.b16 %v463
    %v1053 = vunpack.c.l.b16 %v464
    %v1054 = vunpack.c.h.b16 %v464
    %v1055 = vunpack.c.l.b16 %v465
    %v1056 = vunpack.c.h.b16 %v465
    %v1057 = vunpack.c.l.b16 %v466
    %v1058 = vunpack.c.h.b16 %v466
    %v1059 = vunpack.c.l.b16 %v467
    %v1060 = vunpack.c.h.b16 %v467
    %v1061 = vunpack.c.l.b16 %v468
    %v1062 = vunpack.c.h.b16 %v468
    %v1063 = vunpack.c.l.b16 %v469
    %v1064 = vunpack.c.h.b16 %v469
    %v1065 = vunpack.c.l.b16 %v470
    %v1066 = vunpack.c.h.b16 %v470
    %v1067 = vunpack.c.l.b16 %v471
    %v1068 = vunpack.c.h.b16 %v471
    %v1069 = vunpack.c.l.b16 %v472
    %v1070 = vunpack.c.h.b16 %v472
    %v1071 = vunpack.c.l.b16 %v473
    %v1072 = vunpack.c.h.b16 %v473
    %v1073 = vunpack.c.l.b16 %v474
    %v1074 = vunpack.c.h.b16 %v474
    %v1075 = vunpack.c.l.b16 %v475
    %v1076 = vunpack.c.h.b16 %v475
    %v1077 = vunpack.c.l.b16 %v476
    %v1078 = vunpack.c.h.b16 %v476
    %v1079 = vunpack.c.l.b16 %v477
    %v1080 = vunpack.c.h.b16 %v477
    %v1081 = vunpack.c.l.b16 %v478
    %v1082 = vunpack.c.h.b16 %v478
    %v1083 = vunpack.c.l.b16 %v479
    %v1084 = vunpack.c.h.b16 %v479
    %v1085 = vunpack.c.l.b16 %v480
    %v1086 = vunpack.c.h.b16 %v480
    %v1087 = vunpack.c.l.b16 %v481
    %v1088 = vunpack.c.h.b16 %v481
    %v1089 = vunpack.c.l.b16 %v482
    %v1090 = vunpack.c.h.b16 %v482
    %v1091 = vunpack.c.l.b16 %v483
    %v1092 = vunpack.c.h.b16 %v483
    %v1093 = vunpack.c.l.b16 %v484
    %v1094 = vunpack.c.h.b16 %v484
    %v1095 = vunpack.c.l.b16 %v485
    %v1096 = vunpack.c.h.b16 %v485
    %v1097 = vunpack.c.l.b16 %v486
    %v1098 = vunpack.c.h.b16 %v486
    %v1099 = vunpack.c.l.b16 %v487
    %v1100 = vunpack.c.h.b16 %v487
    %v1101 = vunpack.c.l.b16 %v488
    %v1102 = vunpack.c.h.b16 %v488
    %v1103 = vunpack.c.l.b16 %v489
    %v1104 = vunpack.c.h.b16 %v489
    %v1105 = vunpack.c.l.b16 %v490
    %v1106 = vunpack.c.h.b16 %v490
    %v1107 = vunpack.c.l.b16 %v491
    %v1108 = vunpack.c.h.b16 %v491
    %v1109 = vunpack.c.l.b16 %v492
    %v1110 = vunpack.c.h.b16 %v492
    %v1111 = vunpack.c.l.b16 %v493
    %v1112 = vunpack.c.h.b16 %v493
    %v1113 = vunpack.c.l.b16 %v494
    %v1114 = vunpack.c.h.b16 %v494
    %v1115 = vunpack.c.l.b16 %v495
    %v1116 = vunpack.c.h.b16 %v495
    %v1117 = vunpack.c.l.b16 %v496
    %v1118 = vunpack.c.h.b16 %v496
    %v1119 = vunpack.c.l.b16 %v497
    %v1120 = vunpack.c.h.b16 %v497
    %v1121 = vunpack.c.l.b16 %v498
    %v1122 = vunpack.c.h.b16 %v498
    %v1123 = vunpack.c.l.b16 %v499
    %v1124 = vunpack.c.h.b16 %v499
    %v1125 = vunpack.c.l.b16 %v500
    %v1126 = vunpack.c.h.b16 %v500
    %v1127 = vunpack.c.l.b16 %v501
    %v1128 = vunpack.c.h.b16 %v501
    %v1129 = vunpack.c.l.b16 %v502
    %v1130 = vunpack.c.h.b16 %v502
    %v1131 = vunpack.c.l.b16 %v503
    %v1132 = vunpack.c.h.b16 %v503
    %v1133 = vunpack.c.l.b16 %v504
    %v1134 = vunpack.c.h.b16 %v504
    %v1135 = vunpack.c.l.b16 %v505
    %v1136 = vunpack.c.h.b16 %v505
    %v1137 = vunpack.c.l.b16 %v506
    %v1138 = vunpack.c.h.b16 %v506
    %v1139 = vunpack.c.l.b16 %v507
    %v1140 = vunpack.c.h.b16 %v507
    %v1141 = vunpack.c.l.b16 %v508
    %v1142 = vunpack.c.h.b16 %v508
    %v1143 = vunpack.c.l.b16 %v509
    %v1144 = vunpack.c.h.b16 %v509
    %v1145 = vunpack.c.l.b16 %v510
    %v1146 = vunpack.c.h.b16 %v510
    %v1147 = vunpack.c.l.b16 %v511
    %v1148 = vunpack.c.h.b16 %v511
    %v1149 = vunpack.c.l.b16 %v512
    %v1150 = vunpack.c.h.b16 %v512
    %v1151 = vunpack.c.l.b16 %v513
    %v1152 = vunpack.c.h.b16 %v513
    %v1153 = vunpack.c.l.b16 %v514
    %v1154 = vunpack.c.h.b16 %v514
    %v1155 = vunpack.c.l.b16 %v515
    %v1156 = vunpack.c.h.b16 %v515
    %v1157 = vunpack.c.l.b16 %v516
    %v1158 = vunpack.c.h.b16 %v516
    %v1159 = vunpack.c.l.b16 %v517
    %v1160 = vunpack.c.h.b16 %v517
    %v1161 = vunpack.c.l.b16 %v518
    %v1162 = vunpack.c.h.b16 %v518
    %v1163 = vunpack.c.l.b16 %v519
    %v1164 = vunpack.c.h.b16 %v519
    %v1165 = vunpack.c.l.b16 %v520
    %v1166 = vunpack.c.h.b16 %v520
    %v1167 = vunpack.c.l.b16 %v521
    %v1168 = vunpack.c.h.b16 %v521
    %v1169 = vunpack.c.l.b16 %v522
    %v1170 = vunpack.c.h.b16 %v522
    %v1171 = vunpack.c.l.b16 %v523
    %v1172 = vunpack.c.h.b16 %v523
    %v1173 = vunpack.c.l.b16 %v524
    %v1174 = vunpack.c.h.b16 %v524
    %v1175 = vunpack.c.l.b16 %v525
    %v1176 = vunpack.c.h.b16 %v525
    %v1177 = vunpack.c.l.b16 %v526
    %v1178 = vunpack.c.h.b16 %v526
    %v1179 = vunpack.c.l.b16 %v527
    %v1180 = vunpack.c.h.b16 %v527
    %v1181 = vunpack.c.l.b16 %v528
    %v1182 = vunpack.c.h.b16 %v528
    %v1183 = vunpack.c.l.b16 %v529
    %v1184 = vunpack.c.h.b16 %v529
    %v1185 = vunpack.c.l.b16 %v530
    %v1186 = vunpack.c.h.b16 %v530
    %v1187 = vunpack.c.l.b16 %v531
    %v1188 = vunpack.c.h.b16 %v531
    %v1189 = vunpack.c.l.b16 %v532
    %v1190 = vunpack.c.h.b16 %v532
    %v1191 = vunpack.c.l.b16 %v533
    %v1192 = vunpack.c.h.b16 %v533
    %v1193 = vunpack.c.l.b16 %v534
    %v1194 = vunpack.c.h.b16 %v534
    %v1195 = vunpack.c.l.b16 %v535
    %v1196 = vunpack.c.h.b16 %v535
    %v1197 = vunpack.c.l.b16 %v536
    %v1198 = vunpack.c.h.b16 %v536
    %v1199 = vunpack.c.l.b16 %v537
    %v1200 = vunpack.c.h.b16 %v537
    %v1201 = vunpack.c.l.b16 %v538
    %v1202 = vunpack.c.h.b16 %v538
    %v1203 = vunpack.c.l.b16 %v539
    %v1204 = vunpack.c.h.b16 %v539
    %v1205 = vunpack.c.l.b16 %v540
    %v1206 = vunpack.c.h.b16 %v540
    %v1207 = vunpack.c.l.b16 %v541
    %v1208 = vunpack.c.h.b16 %v541
    %v1209 = vunpack.c.l.b16 %v542
    %v1210 = vunpack.c.h.b16 %v542
    %v1211 = vunpack.c.l.b16 %v543
    %v1212 = vunpack.c.h.b16 %v543
    %v1213 = vunpack.c.l.b16 %v544
    %v1214 = vunpack.c.h.b16 %v544
    %v1215 = vunpack.c.l.b16 %v545
    %v1216 = vunpack.c.h.b16 %v545
    %v1217 = vunpack.c.l.b16 %v546
    %v1218 = vunpack.c.h.b16 %v546
    %v1219 = vunpack.c.l.b16 %v547
    %v1220 = vunpack.c.h.b16 %v547
    %v1221 = vunpack.c.l.b16 %v548
    %v1222 = vunpack.c.h.b16 %v548
    %v1223 = vunpack.c.l.b16 %v549
    %v1224 = vunpack.c.h.b16 %v549
    %v1225 = vunpack.c.l.b16 %v550
    %v1226 = vunpack.c.h.b16 %v550
    %v1227 = vunpack.c.l.b16 %v551
    %v1228 = vunpack.c.h.b16 %v551
    %v1229 = vunpack.c.l.b16 %v552
    %v1230 = vunpack.c.h.b16 %v552
    %v1231 = vunpack.c.l.b16 %v553
    %v1232 = vunpack.c.h.b16 %v553
    %v1233 = vunpack.c.l.b16 %v554
    %v1234 = vunpack.c.h.b16 %v554
    %v1235 = vunpack.c.l.b16 %v555
    %v1236 = vunpack.c.h.b16 %v555
    %v1237 = vunpack.c.l.b16 %v556
    %v1238 = vunpack.c.h.b16 %v556
    %v1239 = vunpack.c.l.b16 %v557
    %v1240 = vunpack.c.h.b16 %v557
    %v1241 = vunpack.c.l.b16 %v558
    %v1242 = vunpack.c.h.b16 %v558
    %v1243 = vunpack.c.l.b16 %v559
    %v1244 = vunpack.c.h.b16 %v559
    %v1245 = vunpack.c.l.b16 %v560
    %v1246 = vunpack.c.h.b16 %v560
    %v1247 = vunpack.c.l.b16 %v561
    %v1248 = vunpack.c.h.b16 %v561
    %v1249 = vunpack.c.l.b16 %v562
    %v1250 = vunpack.c.h.b16 %v562
    %v1251 = vunpack.c.l.b16 %v563
    %v1252 = vunpack.c.h.b16 %v563
    %v1253 = vunpack.c.l.b16 %v564
    %v1254 = vunpack.c.h.b16 %v564
    %v1255 = vunpack.c.l.b16 %v565
    %v1256 = vunpack.c.h.b16 %v565
    %v1257 = vunpack.c.l.b16 %v566
    %v1258 = vunpack.c.h.b16 %v566
    %v1259 = vunpack.c.l.b16 %v567
    %v1260 = vunpack.c.h.b16 %v567
    %v1261 = vunpack.c.l.b16 %v568
    %v1262 = vunpack.c.h.b16 %v568
    %v1263 = vunpack.c.l.b16 %v569
    %v1264 = vunpack.c.h.b16 %v569
    %v1265 = vunpack.c.l.b16 %v570
    %v1266 = vunpack.c.h.b16 %v570
    %v1267 = vunpack.c.l.b16 %v571
    %v1268 = vunpack.c.h.b16 %v571
    %v1269 = vunpack.c.l.b16 %v572
    %v1270 = vunpack.c.h.b16 %v572
    %v1271 = vunpack.c.l.b16 %v573
    %v1272 = vunpack.c.h.b16 %v573
    %v1273 = vunpack.c.l.b16 %v574
    %v1274 = vunpack.c.h.b16 %v574
    %v1275 = vunpack.c.l.b16 %v575
    %v1276 = vunpack.c.h.b16 %v575
    %v1277 = vunpack.c.l.b16 %v576
    %v1278 = vunpack.c.h.b16 %v576
    %v1279 = vunpack.c.l.b16 %v577
    %v1280 = vunpack.c.h.b16 %v577
    %v1281 = vunpack.c.l.b16 %v578
    %v1282 = vunpack.c.h.b16 %v578
    %v1283 = vunpack.c.l.b16 %v579
    %v1284 = vunpack.c.h.b16 %v579
    %v1285 = vunpack.c.l.b16 %v580
    %v1286 = vunpack.c.h.b16 %v580
    %v1287 = vunpack.c.l.b16 %v581
    %v1288 = vunpack.c.h.b16 %v581
    %v1289 = vunpack.c.l.b16 %v582
    %v1290 = vunpack.c.h.b16 %v582
    %v1291 = vunpack.c.l.b16 %v583
    %v1292 = vunpack.c.h.b16 %v583
    %v1293 = vunpack.c.l.b16 %v584
    %v1294 = vunpack.c.h.b16 %v584
    %v1295 = vunpack.c.l.b16 %v585
    %v1296 = vunpack.c.h.b16 %v585
    %v1297 = vunpack.c.l.b16 %v586
    %v1298 = vunpack.c.h.b16 %v586
    %v1299 = vunpack.c.l.b16 %v587
    %v1300 = vunpack.c.h.b16 %v587
    %v1301 = vunpack.c.l.b16 %v588
    %v1302 = vunpack.c.h.b16 %v588
    %v1303 = vunpack.c.l.b16 %v589
    %v1304 = vunpack.c.h.b16 %v589
    %v1305 = vunpack.c.l.b16 %v590
    %v1306 = vunpack.c.h.b16 %v590
    %v1307 = vunpack.c.l.b16 %v591
    %v1308 = vunpack.c.h.b16 %v591
    %v1309 = vunpack.c.l.b16 %v592
    %v1310 = vunpack.c.h.b16 %v592
    %v1311 = vunpack.c.l.b16 %v593
    %v1312 = vunpack.c.h.b16 %v593
    %v1313 = vunpack.c.l.b16 %v594
    %v1314 = vunpack.c.h.b16 %v594
    %v1315 = vunpack.c.l.b16 %v595
    %v1316 = vunpack.c.h.b16 %v595
    %v1317 = vunpack.c.l.b16 %v596
    %v1318 = vunpack.c.h.b16 %v596
    %v1319 = vunpack.c.l.b16 %v597
    %v1320 = vunpack.c.h.b16 %v597
    %v1321 = vunpack.c.l.b16 %v598
    %v1322 = vunpack.c.h.b16 %v598
    %v1323 = vunpack.c.l.b16 %v599
    %v1324 = vunpack.c.h.b16 %v599
    %v1325 = vunpack.c.l.b16 %v600
    %v1326 = vunpack.c.h.b16 %v600
    %v1327 = vunpack.c.l.b16 %v601
    %v1328 = vunpack.c.h.b16 %v601
    %v1329 = vunpack.c.l.b16 %v602
    %v1330 = vunpack.c.h.b16 %v602
    %v1331 = vunpack.c.l.b16 %v603
    %v1332 = vunpack.c.h.b16 %v603
    %v1333 = vunpack.c.l.b16 %v604
    %v1334 = vunpack.c.h.b16 %v604
    %v1335 = vunpack.c.l.b16 %v605
    %v1336 = vunpack.c.h.b16 %v605
    %v1337 = vunpack.c.l.b16 %v606
    %v1338 = vunpack.c.h.b16 %v606
    %v1339 = vunpack.c.l.b16 %v607
    %v1340 = vunpack.c.h.b16 %v607
    %v1341 = vunpack.c.l.b16 %v608
    %v1342 = vunpack.c.h.b16 %v608
    %v1343 = vunpack.c.l.b16 %v609
    %v1344 = vunpack.c.h.b16 %v609
    %v1345 = vunpack.c.l.b16 %v610
    %v1346 = vunpack.c.h.b16 %v610
    %v1347 = vunpack.c.l.b16 %v611
    %v1348 = vunpack.c.h.b16 %v611
    %v1349 = vunpack.c.l.b16 %v612
    %v1350 = vunpack.c.h.b16 %v612
    %v1351 = vunpack.c.l.b16 %v613
    %v1352 = vunpack.c.h.b16 %v613
    %v1353 = vunpack.c.l.b16 %v614
    %v1354 = vunpack.c.h.b16 %v614
    %v1355 = vunpack.c.l.b16 %v615
    %v1356 = vunpack.c.h.b16 %v615
    %v1357 = vunpack.c.l.b16 %v616
    %v1358 = vunpack.c.h.b16 %v616
    %v1359 = vunpack.c.l.b16 %v617
    %v1360 = vunpack.c.h.b16 %v617
    %v1361 = vunpack.c.l.b16 %v618
    %v1362 = vunpack.c.h.b16 %v618
    %v1363 = vunpack.c.l.b16 %v619
    %v1364 = vunpack.c.h.b16 %v619
    %v1365 = vunpack.c.l.b16 %v620
    %v1366 = vunpack.c.h.b16 %v620
    %v1367 = vunpack.c.l.b16 %v621
    %v1368 = vunpack.c.h.b16 %v621
    %v1369 = vunpack.c.l.b16 %v622
    %v1370 = vunpack.c.h.b16 %v622
    %v1371 = vunpack.c.l.b16 %v623
    %v1372 = vunpack.c.h.b16 %v623
    %v1373 = vunpack.c.l.b16 %v624
    %v1374 = vunpack.c.h.b16 %v624
    %v1375 = vunpack.c.l.b16 %v625
    %v1376 = vunpack.c.h.b16 %v625
    %v1377 = vunpack.c.l.b16 %v626
    %v1378 = vunpack.c.h.b16 %v626
    %v1379 = vunpack.c.l.b16 %v627
    %v1380 = vunpack.c.h.b16 %v627
    %v1381 = vunpack.c.l.b16 %v628
    %v1382 = vunpack.c.h.b16 %v628
    %v1383 = vunpack.c.l.b16 %v629
    %v1384 = vunpack.c.h.b16 %v629
    %v1385 = vunpack.c.l.b16 %v630
    %v1386 = vunpack.c.h.b16 %v630
    %v1387 = vunpack.c.l.b16 %v631
    %v1388 = vunpack.c.h.b16 %v631
    %v1389 = vunpack.c.l.b16 %v632
    %v1390 = vunpack.c.h.b16 %v632
    %v1391 = vunpack.c.l.b16 %v633
    %v1392 = vunpack.c.h.b16 %v633
    %v1393 = vunpack.c.l.b16 %v634
    %v1394 = vunpack.c.h.b16 %v634
    %v1395 = vunpack.c.l.b16 %v635
    %v1396 = vunpack.c.h.b16 %v635
    %v1397 = vunpack.c.l.b16 %v636
    %v1398 = vunpack.c.h.b16 %v636
    %v1399 = vunpack.c.l.b16 %v637
    %v1400 = vunpack.c.h.b16 %v637
    %v1401 = vunpack.c.l.b16 %v638
    %v1402 = vunpack.c.h.b16 %v638
    %v1403 = vunpack.c.l.b16 %v639
    %v1404 = vunpack.c.h.b16 %v639
    %v1405 = vunpack.c.l.b16 %v640
    %v1406 = vunpack.c.h.b16 %v640
    %v1407 = vunpack.c.l.b16 %v641
    %v1408 = vunpack.c.h.b16 %v641
    %v1409 = vunpack.c.l.b16 %v642
    %v1410 = vunpack.c.h.b16 %v642
    %v1411 = vunpack.c.l.b16 %v643
    %v1412 = vunpack.c.h.b16 %v643
    %v1413 = vunpack.c.l.b16 %v644
    %v1414 = vunpack.c.h.b16 %v644
    %v1415 = vunpack.c.l.b16 %v645
    %v1416 = vunpack.c.h.b16 %v645
    %v1417 = vunpack.c.l.b16 %v646
    %v1418 = vunpack.c.h.b16 %v646
    %v1419 = vunpack.c.l.b16 %v647
    %v1420 = vunpack.c.h.b16 %v647
    %v1421 = vunpack.c.l.b16 %v648
    %v1422 = vunpack.c.h.b16 %v648
    %v1423 = vunpack.c.l.b16 %v649
    %v1424 = vunpack.c.h.b16 %v649
    %v1425 = vunpack.c.l.b16 %v650
    %v1426 = vunpack.c.h.b16 %v650
    %v1427 = vunpack.c.l.b16 %v651
    %v1428 = vunpack.c.h.b16 %v651
    %v1429 = vunpack.c.l.b16 %v652
    %v1430 = vunpack.c.h.b16 %v652
    %v1431 = vunpack.c.l.b16 %v653
    %v1432 = vunpack.c.h.b16 %v653
    %v1433 = vunpack.c.l.b16 %v654
    %v1434 = vunpack.c.h.b16 %v654
    %v1435 = vunpack.c.l.b16 %v655
    %v1436 = vunpack.c.h.b16 %v655
    %v1437 = vunpack.c.l.b16 %v656
    %v1438 = vunpack.c.h.b16 %v656
    %v1439 = vunpack.c.l.b16 %v657
    %v1440 = vunpack.c.h.b16 %v657
    %v1441 = vunpack.c.l.b16 %v658
    %v1442 = vunpack.c.h.b16 %v658
    %v1443 = vunpack.c.l.b16 %v659
    %v1444 = vunpack.c.h.b16 %v659
    %v1445 = vunpack.c.l.b16 %v660
    %v1446 = vunpack.c.h.b16 %v660
    %v1447 = vunpack.c.l.b16 %v661
    %v1448 = vunpack.c.h.b16 %v661
    %v1449 = vunpack.c.l.b16 %v662
    %v1450 = vunpack.c.h.b16 %v662
    %v1451 = vunpack.c.l.b16 %v663
    %v1452 = vunpack.c.h.b16 %v663
    %v1453 = vunpack.c.l.b16 %v664
    %v1454 = vunpack.c.h.b16 %v664
    %v1455 = vpack.c.b16 %v947, %v943
    %v1456 = vpack.c.b16 %v948, %v944
    %v1457 = vpack.c.b16 %v949, %v945
    %v1458 = vpack.c.b16 %v950, %v946
    %v1459 = vpack.c.b16 %v955, %v951
    %v1460 = vpack.c.b16 %v956, %v952
    %v1461 = vpack.c.b16 %v957, %v953
    %v1462 = vpack.c.b16 %v958, %v954
    %v1463 = vpack.c.b16 %v963, %v959
    %v1464 = vpack.c.b16 %v964, %v960
    %v1465 = vpack.c.b16 %v965, %v961
    %v1466 = vpack.c.b16 %v966, %v962
    %v1467 = vpack.c.b16 %v971, %v967
    %v1468 = vpack.c.b16 %v972, %v968
    %v1469 = vpack.c.b16 %v973, %v969
    %v1470 = vpack.c.b16 %v974, %v970
    %v1471 = vpack.c.b16 %v979, %v975
    %v1472 = vpack.c.b16 %v980, %v976
    %v1473 = vpack.c.b16 %v981, %v977
    %v1474 = vpack.c.b16 %v982, %v978
    %v1475 = vpack.c.b16 %v987, %v983
    %v1476 = vpack.c.b16 %v988, %v984
    %v1477 = vpack.c.b16 %v989, %v985
    %v1478 = vpack.c.b16 %v990, %v986
    %v1479 = vpack.c.b16 %v995, %v991
    %v1480 = vpack.c.b16 %v996, %v992
    %v1481 = vpack.c.b16 %v997, %v993
    %v1482 = vpack.c.b16 %v998, %v994
    %v1483 = vpack.c.b16 %v1003, %v999
    %v1484 = vpack.c.b16 %v1004, %v1000
    %v1485 = vpack.c.b16 %v1005, %v1001
    %v1486 = vpack.c.b16 %v1006, %v1002
    %v1487 = vpack.c.b16 %v1011, %v1007
    %v1488 = vpack.c.b16 %v1012, %v1008
    %v1489 = vpack.c.b16 %v1013, %v1009
    %v1490 = vpack.c.b16 %v1014, %v1010
    %v1491 = vpack.c.b16 %v1019, %v1015
    %v1492 = vpack.c.b16 %v1020, %v1016
    %v1493 = vpack.c.b16 %v1021, %v1017
    %v1494 = vpack.c.b16 %v1022, %v1018
    %v1495 = vpack.c.b16 %v1027, %v1023
    %v1496 = vpack.c.b16 %v1028, %v1024
    %v1497 = vpack.c.b16 %v1029, %v1025
    %v1498 = vpack.c.b16 %v1030, %v1026
    %v1499 = vpack.c.b16 %v1035, %v1031
    %v1500 = vpack.c.b16 %v1036, %v1032
    %v1501 = vpack.c.b16 %v1037, %v1033
    %v1502 = vpack.c.b16 %v1038, %v1034
    %v1503 = vpack.c.b16 %v1043, %v1039
    %v1504 = vpack.c.b16 %v1044, %v1040
    %v1505 = vpack.c.b16 %v1045, %v1041
    %v1506 = vpack.c.b16 %v1046, %v1042
    %v1507 = vpack.c.b16 %v1051, %v1047
    %v1508 = vpack.c.b16 %v1052, %v1048
    %v1509 = vpack.c.b16 %v1053, %v1049
    %v1510 = vpack.c.b16 %v1054, %v1050
    %v1511 = vpack.c.b16 %v1059, %v1055
    %v1512 = vpack.c.b16 %v1060, %v1056
    %v1513 = vpack.c.b16 %v1061, %v1057
    %v1514 = vpack.c.b16 %v1062, %v1058
    %v1515 = vpack.c.b16 %v1067, %v1063
    %v1516 = vpack.c.b16 %v1068, %v1064
    %v1517 = vpack.c.b16 %v1069, %v1065
    %v1518 = vpack.c.b16 %v1070, %v1066
    %v1519 = vpack.c.b16 %v1075, %v1071
    %v1520 = vpack.c.b16 %v1076, %v1072
    %v1521 = vpack.c.b16 %v1077, %v1073
    %v1522 = vpack.c.b16 %v1078, %v1074
    %v1523 = vpack.c.b16 %v1083, %v1079
    %v1524 = vpack.c.b16 %v1084, %v1080
    %v1525 = vpack.c.b16 %v1085, %v1081
    %v1526 = vpack.c.b16 %v1086, %v1082
    %v1527 = vpack.c.b16 %v1091, %v1087
    %v1528 = vpack.c.b16 %v1092, %v1088
    %v1529 = vpack.c.b16 %v1093, %v1089
    %v1530 = vpack.c.b16 %v1094, %v1090
    %v1531 = vpack.c.b16 %v1099, %v1095
    %v1532 = vpack.c.b16 %v1100, %v1096
    %v1533 = vpack.c.b16 %v1101, %v1097
    %v1534 = vpack.c.b16 %v1102, %v1098
    %v1535 = vpack.c.b16 %v1107, %v1103
    %v1536 = vpack.c.b16 %v1108, %v1104
    %v1537 = vpack.c.b16 %v1109, %v1105
    %v1538 = vpack.c.b16 %v1110, %v1106
    %v1539 = vpack.c.b16 %v1115, %v1111
    %v1540 = vpack.c.b16 %v1116, %v1112
    %v1541 = vpack.c.b16 %v1117, %v1113
    %v1542 = vpack.c.b16 %v1118, %v1114
    %v1543 = vpack.c.b16 %v1123, %v1119
    %v1544 = vpack.c.b16 %v1124, %v1120
    %v1545 = vpack.c.b16 %v1125, %v1121
    %v1546 = vpack.c.b16 %v1126, %v1122
    %v1547 = vpack.c.b16 %v1131, %v1127
    %v1548 = vpack.c.b16 %v1132, %v1128
    %v1549 = vpack.c.b16 %v1133, %v1129
    %v1550 = vpack.c.b16 %v1134, %v1130
    %v1551 = vpack.c.b16 %v1139, %v1135
    %v1552 = vpack.c.b16 %v1140, %v1136
    %v1553 = vpack.c.b16 %v1141, %v1137
    %v1554 = vpack.c.b16 %v1142, %v1138
    %v1555 = vpack.c.b16 %v1147, %v1143
    %v1556 = vpack.c.b16 %v1148, %v1144
    %v1557 = vpack.c.b16 %v1149, %v1145
    %v1558 = vpack.c.b16 %v1150, %v1146
    %v1559 = vpack.c.b16 %v1155, %v1151
    %v1560 = vpack.c.b16 %v1156, %v1152
    %v1561 = vpack.c.b16 %v1157, %v1153
    %v1562 = vpack.c.b16 %v1158, %v1154
    %v1563 = vpack.c.b16 %v1163, %v1159
    %v1564 = vpack.c.b16 %v1164, %v1160
    %v1565 = vpack.c.b16 %v1165, %v1161
    %v1566 = vpack.c.b16 %v1166, %v1162
    %v1567 = vpack.c.b16 %v1171, %v1167
    %v1568 = vpack.c.b16 %v1172, %v1168
    %v1569 = vpack.c.b16 %v1173, %v1169
    %v1570 = vpack.c.b16 %v1174, %v1170
    %v1571 = vpack.c.b16 %v1179, %v1175
    %v1572 = vpack.c.b16 %v1180, %v1176
    %v1573 = vpack.c.b16 %v1181, %v1177
    %v1574 = vpack.c.b16 %v1182, %v1178
    %v1575 = vpack.c.b16 %v1187, %v1183
    %v1576 = vpack.c.b16 %v1188, %v1184
    %v1577 = vpack.c.b16 %v1189, %v1185
    %v1578 = vpack.c.b16 %v1190, %v1186
    %v1579 = vpack.c.b16 %v1195, %v1191
    %v1580 = vpack.c.b16 %v1196, %v1192
    %v1581 = vpack.c.b16 %v1197, %v1193
    %v1582 = vpack.c.b16 %v1198, %v1194
    %v1583 = vpack.c.b16 %v1203, %v1199
    %v1584 = vpack.c.b16 %v1204, %v1200
    %v1585 = vpack.c.b16 %v1205, %v1201
    %v1586 = vpack.c.b16 %v1206, %v1202
    %v1587 = vpack.c.b16 %v1211, %v1207
    %v1588 = vpack.c.b16 %v1212, %v1208
    %v1589 = vpack.c.b16 %v1213, %v1209
    %v1590 = vpack.c.b16 %v1214, %v1210
    %v1591 = vpack.c.b16 %v1219, %v1215
    %v1592 = vpack.c.b16 %v1220, %v1216
    %v1593 = vpack.c.b16 %v1221, %v1217
    %v1594 = vpack.c.b16 %v1222, %v1218
    %v1595 = vpack.c.b16 %v1227, %v1223
    %v1596 = vpack.c.b16 %v1228, %v1224
    %v1597 = vpack.c.b16 %v1229, %v1225
    %v1598 = vpack.c.b16 %v1230, %v1226
    %v1599 = vpack.c.b16 %v1235, %v1231
    %v1600 = vpack.c.b16 %v1236, %v1232
    %v1601 = vpack.c.b16 %v1237, %v1233
    %v1602 = vpack.c.b16 %v1238, %v1234
    %v1603 = vpack.c.b16 %v1243, %v1239
    %v1604 = vpack.c.b16 %v1244, %v1240
    %v1605 = vpack.c.b16 %v1245, %v1241
    %v1606 = vpack.c.b16 %v1246, %v1242
    %v1607 = vpack.c.b16 %v1251, %v1247
    %v1608 = vpack.c.b16 %v1252, %v1248
    %v1609 = vpack.c.b16 %v1253, %v1249
    %v1610 = vpack.c.b16 %v1254, %v1250
    %v1611 = vpack.c.b16 %v1259, %v1255
    %v1612 = vpack.c.b16 %v1260, %v1256
    %v1613 = vpack.c.b16 %v1261, %v1257
    %v1614 = vpack.c.b16 %v1262, %v1258
    %v1615 = vpack.c.b16 %v1267, %v1263
    %v1616 = vpack.c.b16 %v1268, %v1264
    %v1617 = vpack.c.b16 %v1269, %v1265
    %v1618 = vpack.c.b16 %v1270, %v1266
    %v1619 = vpack.c.b16 %v1275, %v1271
    %v1620 = vpack.c.b16 %v1276, %v1272
    %v1621 = vpack.c.b16 %v1277, %v1273
    %v1622 = vpack.c.b16 %v1278, %v1274
    %v1623 = vpack.c.b16 %v1283, %v1279
    %v1624 = vpack.c.b16 %v1284, %v1280
    %v1625 = vpack.c.b16 %v1285, %v1281
    %v1626 = vpack.c.b16 %v1286, %v1282
    %v1627 = vpack.c.b16 %v1291, %v1287
    %v1628 = vpack.c.b16 %v1292, %v1288
    %v1629 = vpack.c.b16 %v1293, %v1289
    %v1630 = vpack.c.b16 %v1294, %v1290
    %v1631 = vpack.c.b16 %v1299, %v1295
    %v1632 = vpack.c.b16 %v1300, %v1296
    %v1633 = vpack.c.b16 %v1301, %v1297
    %v1634 = vpack.c.b16 %v1302, %v1298
    %v1635 = vpack.c.b16 %v1307, %v1303
    %v1636 = vpack.c.b16 %v1308, %v1304
    %v1637 = vpack.c.b16 %v1309, %v1305
    %v1638 = vpack.c.b16 %v1310, %v1306
    %v1639 = vpack.c.b16 %v1315, %v1311
    %v1640 = vpack.c.b16 %v1316, %v1312
    %v1641 = vpack.c.b16 %v1317, %v1313
    %v1642 = vpack.c.b16 %v1318, %v1314
    %v1643 = vpack.c.b16 %v1323, %v1319
    %v1644 = vpack.c.b16 %v1324, %v1320
    %v1645 = vpack.c.b16 %v1325, %v1321
    %v1646 = vpack.c.b16 %v1326, %v1322
    %v1647 = vpack.c.b16 %v1331, %v1327
    %v1648 = vpack.c.b16 %v1332, %v1328
    %v1649 = vpack.c.b16 %v1333, %v1329
    %v1650 = vpack.c.b16 %v1334, %v1330
    %v1651 = vpack.c.b16 %v1339, %v1335
    %v1652 = vpack.c.b16 %v1340, %v1336
    %v1653 = vpack.c.b16 %v1341, %v1337
    %v1654 = vpack.c.b16 %v1342, %v1338
    %v1655 = vpack.c.b16 %v1347, %v1343
    %v1656 = vpack.c.b16 %v1348, %v1344
    %v1657 = vpack.c.b16 %v1349, %v1345
    %v1658 = vpack.c.b16 %v1350, %v1346
    %v1659 = vpack.c.b16 %v1355, %v1351
    %v1660 = vpack.c.b16 %v1356, %v1352
    %v1661 = vpack.c.b16 %v1357, %v1353
    %v1662 = vpack.c.b16 %v1358, %v1354
    %v1663 = vpack.c.b16 %v1363, %v1359
    %v1664 = vpack.c.b16 %v1364, %v1360
    %v1665 = vpack.c.b16 %v1365, %v1361
    %v1666 = vpack.c.b16 %v1366, %v1362
    %v1667 = vpack.c.b16 %v1371, %v1367
    %v1668 = vpack.c.b16 %v1372, %v1368
    %v1669 = vpack.c.b16 %v1373, %v1369
    %v1670 = vpack.c.b16 %v1374, %v1370
    %v1671 = vpack.c.b16 %v1379, %v1375
    %v1672 = vpack.c.b16 %v1380, %v1376
    %v1673 = vpack.c.b16 %v1381, %v1377
    %v1674 = vpack.c.b16 %v1382, %v1378
    %v1675 = vpack.c.b16 %v1387, %v1383
    %v1676 = vpack.c.b16 %v1388, %v1384
    %v1677 = vpack.c.b16 %v1389, %v1385
    %v1678 = vpack.c.b16 %v1390, %v1386
    %v1679 = vpack.c.b16 %v1395, %v1391
    %v1680 = vpack.c.b16 %v1396, %v1392
    %v1681 = vpack.c.b16 %v1397, %v1393
    %v1682 = vpack.c.b16 %v1398, %v1394
    %v1683 = vpack.c.b16 %v1403, %v1399
    %v1684 = vpack.c.b16 %v1404, %v1400
    %v1685 = vpack.c.b16 %v1405, %v1401
    %v1686 = vpack.c.b16 %v1406, %v1402
    %v1687 = vpack.c.b16 %v1411, %v1407
    %v1688 = vpack.c.b16 %v1412, %v1408
    %v1689 = vpack.c.b16 %v1413, %v1409
    %v1690 = vpack.c.b16 %v1414, %v1410
    %v1691 = vpack.c.b16 %v1419, %v1415
    %v1692 = vpack.c.b16 %v1420, %v1416
    %v1693 = vpack.c.b16 %v1421, %v1417
    %v1694 = vpack.c.b16 %v1422, %v1418
    %v1695 = vpack.c.b16 %v1427, %v1423
    %v1696 = vpack.c.b16 %v1428, %v1424
    %v1697 = vpack.c.b16 %v1429, %v1425
    %v1698 = vpack.c.b16 %v1430, %v1426
    %v1699 = vpack.c.b16 %v1435, %v1431
    %v1700 = vpack.c.b16 %v1436, %v1432
    %v1701 = vpack.c.b16 %v1437, %v1433
    %v1702 = vpack.c.b16 %v1438, %v1434
    %v1703 = vpack.c.b16 %v1443, %v1439
    %v1704 = vpack.c.b16 %v1444, %v1440
    %v1705 = vpack.c.b16 %v1445, %v1441
    %v1706 = vpack.c.b16 %v1446, %v1442
    %v1707 = vpack.c.b16 %v1451, %v1447
    %v1708 = vpack.c.b16 %v1452, %v1448
    %v1709 = vpack.c.b16 %v1453, %v1449
    %v1710 = vpack.c.b16 %v1454, %v1450
    %1967 = vmatprep.subr.bf16.mxu0 %v1484
    %1968 = vmatpush1.bf16.msra.mxu0 %v1483
    %1969 = vmatprep.subr.bf16.mxu0 %v1480
    %1970 = vmatpush1.bf16.msra.mxu0 %v1479
    %1971 = vmatprep.subr.bf16.mxu0 %v1476
    %1972 = vmatpush1.bf16.msra.mxu0 %v1475
    %1973 = vmatprep.subr.bf16.mxu0 %v1472
    %1974 = vmatpush1.bf16.msra.mxu0 %v1471
    %1975 = vmatprep.subr.bf16.mxu0 %v1468
    %1976 = vmatpush1.bf16.msra.mxu0 %v1467
    %1977 = vmatprep.subr.bf16.mxu0 %v1464
    %1978 = vmatpush1.bf16.msra.mxu0 %v1463
    %1979 = vmatprep.subr.bf16.mxu0 %v1460
    %1980 = vmatpush1.bf16.msra.mxu0 %v1459
    %1981 = vmatprep.subr.bf16.mxu0 %v1456
    %1982 = vmatpush1.bf16.msra.mxu0 %v1455
    %1983 = vmatprep.subr.bf16.mxu0 %v1516
    %1984 = vmatpush2.bf16.msra.mxu0 %v1515
    %1985 = vmatprep.subr.bf16.mxu0 %v1512
    %1986 = vmatpush2.bf16.msra.mxu0 %v1511
    %1987 = vmatprep.subr.bf16.mxu0 %v1508
    %1988 = vmatpush2.bf16.msra.mxu0 %v1507
    %1989 = vmatprep.subr.bf16.mxu0 %v1504
    %1990 = vmatpush2.bf16.msra.mxu0 %v1503
    %1991 = vmatprep.subr.bf16.mxu0 %v1500
    %1992 = vmatpush2.bf16.msra.mxu0 %v1499
    %1993 = vmatprep.subr.bf16.mxu0 %v1496
    %1994 = vmatpush2.bf16.msra.mxu0 %v1495
    %1995 = vmatprep.subr.bf16.mxu0 %v1492
    %1996 = vmatpush2.bf16.msra.mxu0 %v1491
    %1997 = vmatprep.subr.bf16.mxu0 %v1488
    %1998 = vmatpush2.bf16.msra.mxu0 %v1487
    %1999 = vmatprep.mubr.bf16.mxu0 %v402
    %2000 = vmatmul.mubr.bf16.gmra.mxu0 %v401
    %v2001 = vpop.f32.mrf.mxu0
    %v2002 = vadd.f32 %v670, %v2001
    %v2003 = vpop.f32.mrf.mxu0
    %v2004 = vadd.f32 %v674, %v2003
    %v2005 = vpop.f32.mrf.mxu0
    %v2006 = vadd.f32 %v670, %v2005
    %v2007 = vpop.f32.mrf.mxu0
    %v2008 = vadd.f32 %v674, %v2007
    %2009 = vdwg.mxu0
    %2010 = vmatprep.subr.bf16.mxu0 %v1548
    %2011 = vmatpush1.bf16.msra.mxu0 %v1547
    %2012 = vmatprep.subr.bf16.mxu0 %v1544
    %2013 = vmatpush1.bf16.msra.mxu0 %v1543
    %2014 = vmatprep.subr.bf16.mxu0 %v1540
    %2015 = vmatpush1.bf16.msra.mxu0 %v1539
    %2016 = vmatprep.subr.bf16.mxu0 %v1536
    %2017 = vmatpush1.bf16.msra.mxu0 %v1535
    %2018 = vmatprep.subr.bf16.mxu0 %v1532
    %2019 = vmatpush1.bf16.msra.mxu0 %v1531
    %2020 = vmatprep.subr.bf16.mxu0 %v1528
    %2021 = vmatpush1.bf16.msra.mxu0 %v1527
    %2022 = vmatprep.subr.bf16.mxu0 %v1524
    %2023 = vmatpush1.bf16.msra.mxu0 %v1523
    %2024 = vmatprep.subr.bf16.mxu0 %v1520
    %2025 = vmatpush1.bf16.msra.mxu0 %v1519
    %2026 = vmatprep.subr.bf16.mxu0 %v1580
    %2027 = vmatpush2.bf16.msra.mxu0 %v1579
    %2028 = vmatprep.subr.bf16.mxu0 %v1576
    %2029 = vmatpush2.bf16.msra.mxu0 %v1575
    %2030 = vmatprep.subr.bf16.mxu0 %v1572
    %2031 = vmatpush2.bf16.msra.mxu0 %v1571
    %2032 = vmatprep.subr.bf16.mxu0 %v1568
    %2033 = vmatpush2.bf16.msra.mxu0 %v1567
    %2034 = vmatprep.subr.bf16.mxu0 %v1564
    %2035 = vmatpush2.bf16.msra.mxu0 %v1563
    %2036 = vmatprep.subr.bf16.mxu0 %v1560
    %2037 = vmatpush2.bf16.msra.mxu0 %v1559
    %2038 = vmatprep.subr.bf16.mxu0 %v1556
    %2039 = vmatpush2.bf16.msra.mxu0 %v1555
    %2040 = vmatprep.subr.bf16.mxu0 %v1552
    %2041 = vmatpush2.bf16.msra.mxu0 %v1551
    %2042 = vmatprep.mubr.bf16.mxu0 %v404
    %2043 = vmatmul.mubr.bf16.gmra.mxu0 %v403
    %v2044 = vpop.f32.mrf.mxu0
    %v2045 = vadd.f32 %v2002, %v2044
    %v2046 = vpop.f32.mrf.mxu0
    %v2047 = vadd.f32 %v2004, %v2046
    %v2048 = vpop.f32.mrf.mxu0
    %v2049 = vadd.f32 %v2006, %v2048
    %v2050 = vpop.f32.mrf.mxu0
    %v2051 = vadd.f32 %v2008, %v2050
    %2052 = vdwg.mxu0
    %2053 = vmatprep.subr.bf16.mxu0 %v1612
    %2054 = vmatpush1.bf16.msra.mxu0 %v1611
    %2055 = vmatprep.subr.bf16.mxu0 %v1608
    %2056 = vmatpush1.bf16.msra.mxu0 %v1607
    %2057 = vmatprep.subr.bf16.mxu0 %v1604
    %2058 = vmatpush1.bf16.msra.mxu0 %v1603
    %2059 = vmatprep.subr.bf16.mxu0 %v1600
    %2060 = vmatpush1.bf16.msra.mxu0 %v1599
    %2061 = vmatprep.subr.bf16.mxu0 %v1596
    %2062 = vmatpush1.bf16.msra.mxu0 %v1595
    %2063 = vmatprep.subr.bf16.mxu0 %v1592
    %2064 = vmatpush1.bf16.msra.mxu0 %v1591
    %2065 = vmatprep.subr.bf16.mxu0 %v1588
    %2066 = vmatpush1.bf16.msra.mxu0 %v1587
    %2067 = vmatprep.subr.bf16.mxu0 %v1584
    %2068 = vmatpush1.bf16.msra.mxu0 %v1583
    %2069 = vmatprep.subr.bf16.mxu0 %v1644
    %2070 = vmatpush2.bf16.msra.mxu0 %v1643
    %2071 = vmatprep.subr.bf16.mxu0 %v1640
    %2072 = vmatpush2.bf16.msra.mxu0 %v1639
    %2073 = vmatprep.subr.bf16.mxu0 %v1636
    %2074 = vmatpush2.bf16.msra.mxu0 %v1635
    %2075 = vmatprep.subr.bf16.mxu0 %v1632
    %2076 = vmatpush2.bf16.msra.mxu0 %v1631
    %2077 = vmatprep.subr.bf16.mxu0 %v1628
    %2078 = vmatpush2.bf16.msra.mxu0 %v1627
    %2079 = vmatprep.subr.bf16.mxu0 %v1624
    %2080 = vmatpush2.bf16.msra.mxu0 %v1623
    %2081 = vmatprep.subr.bf16.mxu0 %v1620
    %2082 = vmatpush2.bf16.msra.mxu0 %v1619
    %2083 = vmatprep.subr.bf16.mxu0 %v1616
    %2084 = vmatpush2.bf16.msra.mxu0 %v1615
    %2085 = vmatprep.mubr.bf16.mxu0 %v406
    %2086 = vmatmul.mubr.bf16.gmra.mxu0 %v405
    %v2087 = vpop.f32.mrf.mxu0
    %v2088 = vadd.f32 %v2045, %v2087
    %v2089 = vpop.f32.mrf.mxu0
    %v2090 = vadd.f32 %v2047, %v2089
    %v2091 = vpop.f32.mrf.mxu0
    %v2092 = vadd.f32 %v2049, %v2091
    %v2093 = vpop.f32.mrf.mxu0
    %v2094 = vadd.f32 %v2051, %v2093
    %2095 = vdwg.mxu0
    %2096 = vmatprep.subr.bf16.mxu0 %v1676
    %2097 = vmatpush1.bf16.msra.mxu0 %v1675
    %2098 = vmatprep.subr.bf16.mxu0 %v1672
    %2099 = vmatpush1.bf16.msra.mxu0 %v1671
    %2100 = vmatprep.subr.bf16.mxu0 %v1668
    %2101 = vmatpush1.bf16.msra.mxu0 %v1667
    %2102 = vmatprep.subr.bf16.mxu0 %v1664
    %2103 = vmatpush1.bf16.msra.mxu0 %v1663
    %2104 = vmatprep.subr.bf16.mxu0 %v1660
    %2105 = vmatpush1.bf16.msra.mxu0 %v1659
    %2106 = vmatprep.subr.bf16.mxu0 %v1656
    %2107 = vmatpush1.bf16.msra.mxu0 %v1655
    %2108 = vmatprep.subr.bf16.mxu0 %v1652
    %2109 = vmatpush1.bf16.msra.mxu0 %v1651
    %2110 = vmatprep.subr.bf16.mxu0 %v1648
    %2111 = vmatpush1.bf16.msra.mxu0 %v1647
    %2112 = vmatprep.subr.bf16.mxu0 %v1708
    %2113 = vmatpush2.bf16.msra.mxu0 %v1707
    %2114 = vmatprep.subr.bf16.mxu0 %v1704
    %2115 = vmatpush2.bf16.msra.mxu0 %v1703
    %2116 = vmatprep.subr.bf16.mxu0 %v1700
    %2117 = vmatpush2.bf16.msra.mxu0 %v1699
    %2118 = vmatprep.subr.bf16.mxu0 %v1696
    %2119 = vmatpush2.bf16.msra.mxu0 %v1695
    %2120 = vmatprep.subr.bf16.mxu0 %v1692
    %2121 = vmatpush2.bf16.msra.mxu0 %v1691
    %2122 = vmatprep.subr.bf16.mxu0 %v1688
    %2123 = vmatpush2.bf16.msra.mxu0 %v1687
    %2124 = vmatprep.subr.bf16.mxu0 %v1684
    %2125 = vmatpush2.bf16.msra.mxu0 %v1683
    %2126 = vmatprep.subr.bf16.mxu0 %v1680
    %2127 = vmatpush2.bf16.msra.mxu0 %v1679
    %2128 = vmatprep.mubr.bf16.mxu0 %v408
    %2129 = vmatmul.mubr.bf16.gmra.mxu0 %v407
    %v2130 = vpop.f32.mrf.mxu0
    %v2131 = vadd.f32 %v2088, %v2130
    %v2132 = vpop.f32.mrf.mxu0
    %v2133 = vadd.f32 %v2090, %v2132
    %v2134 = vpop.f32.mrf.mxu0
    %v2135 = vadd.f32 %v2092, %v2134
    %v2136 = vpop.f32.mrf.mxu0
    %v2137 = vadd.f32 %v2094, %v2136
    %2138 = vdwg.mxu0
    %2139 = vmatprep.subr.bf16.mxu0 %v1486
    %2140 = vmatpush1.bf16.msra.mxu0 %v1485
    %2141 = vmatprep.subr.bf16.mxu0 %v1482
    %2142 = vmatpush1.bf16.msra.mxu0 %v1481
    %2143 = vmatprep.subr.bf16.mxu0 %v1478
    %2144 = vmatpush1.bf16.msra.mxu0 %v1477
    %2145 = vmatprep.subr.bf16.mxu0 %v1474
    %2146 = vmatpush1.bf16.msra.mxu0 %v1473
    %2147 = vmatprep.subr.bf16.mxu0 %v1470
    %2148 = vmatpush1.bf16.msra.mxu0 %v1469
    %2149 = vmatprep.subr.bf16.mxu0 %v1466
    %2150 = vmatpush1.bf16.msra.mxu0 %v1465
    %2151 = vmatprep.subr.bf16.mxu0 %v1462
    %2152 = vmatpush1.bf16.msra.mxu0 %v1461
    %2153 = vmatprep.subr.bf16.mxu0 %v1458
    %2154 = vmatpush1.bf16.msra.mxu0 %v1457
    %2155 = vmatprep.subr.bf16.mxu0 %v1518
    %2156 = vmatpush2.bf16.msra.mxu0 %v1517
    %2157 = vmatprep.subr.bf16.mxu0 %v1514
    %2158 = vmatpush2.bf16.msra.mxu0 %v1513
    %2159 = vmatprep.subr.bf16.mxu0 %v1510
    %2160 = vmatpush2.bf16.msra.mxu0 %v1509
    %2161 = vmatprep.subr.bf16.mxu0 %v1506
    %2162 = vmatpush2.bf16.msra.mxu0 %v1505
    %2163 = vmatprep.subr.bf16.mxu0 %v1502
    %2164 = vmatpush2.bf16.msra.mxu0 %v1501
    %2165 = vmatprep.subr.bf16.mxu0 %v1498
    %2166 = vmatpush2.bf16.msra.mxu0 %v1497
    %2167 = vmatprep.subr.bf16.mxu0 %v1494
    %2168 = vmatpush2.bf16.msra.mxu0 %v1493
    %2169 = vmatprep.subr.bf16.mxu0 %v1490
    %2170 = vmatpush2.bf16.msra.mxu0 %v1489
    %2171 = vmatprep.mubr.bf16.mxu0 %v402
    %2172 = vmatmul.mubr.bf16.gmra.mxu0 %v401
    %v2173 = vpop.f32.mrf.mxu0
    %v2174 = vadd.f32 %v678, %v2173
    %v2175 = vpop.f32.mrf.mxu0
    %v2176 = vadd.f32 %v682, %v2175
    %v2177 = vpop.f32.mrf.mxu0
    %v2178 = vadd.f32 %v678, %v2177
    %v2179 = vpop.f32.mrf.mxu0
    %v2180 = vadd.f32 %v682, %v2179
    %2181 = vdwg.mxu0
    %2182 = vmatprep.subr.bf16.mxu0 %v1550
    %2183 = vmatpush1.bf16.msra.mxu0 %v1549
    %2184 = vmatprep.subr.bf16.mxu0 %v1546
    %2185 = vmatpush1.bf16.msra.mxu0 %v1545
    %2186 = vmatprep.subr.bf16.mxu0 %v1542
    %2187 = vmatpush1.bf16.msra.mxu0 %v1541
    %2188 = vmatprep.subr.bf16.mxu0 %v1538
    %2189 = vmatpush1.bf16.msra.mxu0 %v1537
    %2190 = vmatprep.subr.bf16.mxu0 %v1534
    %2191 = vmatpush1.bf16.msra.mxu0 %v1533
    %2192 = vmatprep.subr.bf16.mxu0 %v1530
    %2193 = vmatpush1.bf16.msra.mxu0 %v1529
    %2194 = vmatprep.subr.bf16.mxu0 %v1526
    %2195 = vmatpush1.bf16.msra.mxu0 %v1525
    %2196 = vmatprep.subr.bf16.mxu0 %v1522
    %2197 = vmatpush1.bf16.msra.mxu0 %v1521
    %2198 = vmatprep.subr.bf16.mxu0 %v1582
    %2199 = vmatpush2.bf16.msra.mxu0 %v1581
    %2200 = vmatprep.subr.bf16.mxu0 %v1578
    %2201 = vmatpush2.bf16.msra.mxu0 %v1577
    %2202 = vmatprep.subr.bf16.mxu0 %v1574
    %2203 = vmatpush2.bf16.msra.mxu0 %v1573
    %2204 = vmatprep.subr.bf16.mxu0 %v1570
    %2205 = vmatpush2.bf16.msra.mxu0 %v1569
    %2206 = vmatprep.subr.bf16.mxu0 %v1566
    %2207 = vmatpush2.bf16.msra.mxu0 %v1565
    %2208 = vmatprep.subr.bf16.mxu0 %v1562
    %2209 = vmatpush2.bf16.msra.mxu0 %v1561
    %2210 = vmatprep.subr.bf16.mxu0 %v1558
    %2211 = vmatpush2.bf16.msra.mxu0 %v1557
    %2212 = vmatprep.subr.bf16.mxu0 %v1554
    %2213 = vmatpush2.bf16.msra.mxu0 %v1553
    %2214 = vmatprep.mubr.bf16.mxu0 %v404
    %2215 = vmatmul.mubr.bf16.gmra.mxu0 %v403
    %v2216 = vpop.f32.mrf.mxu0
    %v2217 = vadd.f32 %v2174, %v2216
    %v2218 = vpop.f32.mrf.mxu0
    %v2219 = vadd.f32 %v2176, %v2218
    %v2220 = vpop.f32.mrf.mxu0
    %v2221 = vadd.f32 %v2178, %v2220
    %v2222 = vpop.f32.mrf.mxu0
    %v2223 = vadd.f32 %v2180, %v2222
    %2224 = vdwg.mxu0
    %2225 = vmatprep.subr.bf16.mxu0 %v1614
    %2226 = vmatpush1.bf16.msra.mxu0 %v1613
    %2227 = vmatprep.subr.bf16.mxu0 %v1610
    %2228 = vmatpush1.bf16.msra.mxu0 %v1609
    %2229 = vmatprep.subr.bf16.mxu0 %v1606
    %2230 = vmatpush1.bf16.msra.mxu0 %v1605
    %2231 = vmatprep.subr.bf16.mxu0 %v1602
    %2232 = vmatpush1.bf16.msra.mxu0 %v1601
    %2233 = vmatprep.subr.bf16.mxu0 %v1598
    %2234 = vmatpush1.bf16.msra.mxu0 %v1597
    %2235 = vmatprep.subr.bf16.mxu0 %v1594
    %2236 = vmatpush1.bf16.msra.mxu0 %v1593
    %2237 = vmatprep.subr.bf16.mxu0 %v1590
    %2238 = vmatpush1.bf16.msra.mxu0 %v1589
    %2239 = vmatprep.subr.bf16.mxu0 %v1586
    %2240 = vmatpush1.bf16.msra.mxu0 %v1585
    %2241 = vmatprep.subr.bf16.mxu0 %v1646
    %2242 = vmatpush2.bf16.msra.mxu0 %v1645
    %2243 = vmatprep.subr.bf16.mxu0 %v1642
    %2244 = vmatpush2.bf16.msra.mxu0 %v1641
    %2245 = vmatprep.subr.bf16.mxu0 %v1638
    %2246 = vmatpush2.bf16.msra.mxu0 %v1637
    %2247 = vmatprep.subr.bf16.mxu0 %v1634
    %2248 = vmatpush2.bf16.msra.mxu0 %v1633
    %2249 = vmatprep.subr.bf16.mxu0 %v1630
    %2250 = vmatpush2.bf16.msra.mxu0 %v1629
    %2251 = vmatprep.subr.bf16.mxu0 %v1626
    %2252 = vmatpush2.bf16.msra.mxu0 %v1625
    %2253 = vmatprep.subr.bf16.mxu0 %v1622
    %2254 = vmatpush2.bf16.msra.mxu0 %v1621
    %2255 = vmatprep.subr.bf16.mxu0 %v1618
    %2256 = vmatpush2.bf16.msra.mxu0 %v1617
    %2257 = vmatprep.mubr.bf16.mxu0 %v406
    %2258 = vmatmul.mubr.bf16.gmra.mxu0 %v405
    %v2259 = vpop.f32.mrf.mxu0
    %v2260 = vadd.f32 %v2217, %v2259
    %v2261 = vpop.f32.mrf.mxu0
    %v2262 = vadd.f32 %v2219, %v2261
    %v2263 = vpop.f32.mrf.mxu0
    %v2264 = vadd.f32 %v2221, %v2263
    %v2265 = vpop.f32.mrf.mxu0
    %v2266 = vadd.f32 %v2223, %v2265
    %2267 = vdwg.mxu0
    %2268 = vmatprep.subr.bf16.mxu0 %v1678
    %2269 = vmatpush1.bf16.msra.mxu0 %v1677
    %2270 = vmatprep.subr.bf16.mxu0 %v1674
    %2271 = vmatpush1.bf16.msra.mxu0 %v1673
    %2272 = vmatprep.subr.bf16.mxu0 %v1670
    %2273 = vmatpush1.bf16.msra.mxu0 %v1669
    %2274 = vmatprep.subr.bf16.mxu0 %v1666
    %2275 = vmatpush1.bf16.msra.mxu0 %v1665
    %2276 = vmatprep.subr.bf16.mxu0 %v1662
    %2277 = vmatpush1.bf16.msra.mxu0 %v1661
    %2278 = vmatprep.subr.bf16.mxu0 %v1658
    %2279 = vmatpush1.bf16.msra.mxu0 %v1657
    %2280 = vmatprep.subr.bf16.mxu0 %v1654
    %2281 = vmatpush1.bf16.msra.mxu0 %v1653
    %2282 = vmatprep.subr.bf16.mxu0 %v1650
    %2283 = vmatpush1.bf16.msra.mxu0 %v1649
    %2284 = vmatprep.subr.bf16.mxu0 %v1710
    %2285 = vmatpush2.bf16.msra.mxu0 %v1709
    %2286 = vmatprep.subr.bf16.mxu0 %v1706
    %2287 = vmatpush2.bf16.msra.mxu0 %v1705
    %2288 = vmatprep.subr.bf16.mxu0 %v1702
    %2289 = vmatpush2.bf16.msra.mxu0 %v1701
    %2290 = vmatprep.subr.bf16.mxu0 %v1698
    %2291 = vmatpush2.bf16.msra.mxu0 %v1697
    %2292 = vmatprep.subr.bf16.mxu0 %v1694
    %2293 = vmatpush2.bf16.msra.mxu0 %v1693
    %2294 = vmatprep.subr.bf16.mxu0 %v1690
    %2295 = vmatpush2.bf16.msra.mxu0 %v1689
    %2296 = vmatprep.subr.bf16.mxu0 %v1686
    %2297 = vmatpush2.bf16.msra.mxu0 %v1685
    %2298 = vmatprep.subr.bf16.mxu0 %v1682
    %2299 = vmatpush2.bf16.msra.mxu0 %v1681
    %2300 = vmatprep.mubr.bf16.mxu0 %v408
    %2301 = vmatmul.mubr.bf16.gmra.mxu0 %v407
    %v2302 = vpop.f32.mrf.mxu0
    %v2303 = vadd.f32 %v2260, %v2302
    %v2304 = vpop.f32.mrf.mxu0
    %v2305 = vadd.f32 %v2262, %v2304
    %v2306 = vpop.f32.mrf.mxu0
    %v2307 = vadd.f32 %v2264, %v2306
    %v2308 = vpop.f32.mrf.mxu0
    %v2309 = vadd.f32 %v2266, %v2308
    %2310 = vdwg.mxu0
    %v2311 = vmax.f32 %v2131, 0.0
    %v2312 = vmax.f32 %v2133, 0.0
    %v2313 = vmax.f32 %v2303, 0.0
    %v2314 = vmax.f32 %v2305, 0.0
    %v2315 = vmax.f32 %v2135, 0.0
    %v2316 = vmax.f32 %v2137, 0.0
    %v2317 = vmax.f32 %v2307, 0.0
    %v2318 = vmax.f32 %v2309, 0.0
    %v2319 = vpack.c.bf16 %v2315, %v2311
    %v2320 = vpack.c.bf16 %v2316, %v2312
    %v2321 = vpack.c.bf16 %v2317, %v2313
    %v2322 = vpack.c.bf16 %v2318, %v2314
    %v2323 = vld [vmem:[#allocation6] sm:$0xff]
    %v2324 = vld [vmem:[#allocation6 + $0x8] sm:$0xff]
    %v2325 = vld [vmem:[#allocation6 + $0x10] sm:$0xff]
    %v2326 = vld [vmem:[#allocation6 + $0x18] sm:$0xff]
    %v2327 = vld [vmem:[#allocation6 + $0x20] sm:$0xff]
    %v2328 = vld [vmem:[#allocation6 + $0x28] sm:$0xff]
    %v2329 = vld [vmem:[#allocation6 + $0x30] sm:$0xff]
    %v2330 = vld [vmem:[#allocation6 + $0x38] sm:$0xff]
    %v2331 = vld [vmem:[#allocation6 + $0x40] sm:$0xff]
    %v2332 = vld [vmem:[#allocation6 + $0x48] sm:$0xff]
    %v2333 = vld [vmem:[#allocation6 + $0x50] sm:$0xff]
    %v2334 = vld [vmem:[#allocation6 + $0x58] sm:$0xff]
    %v2335 = vld [vmem:[#allocation6 + $0x60] sm:$0xff]
    %v2336 = vld [vmem:[#allocation6 + $0x68] sm:$0xff]
    %v2337 = vld [vmem:[#allocation6 + $0x70] sm:$0xff]
    %v2338 = vld [vmem:[#allocation6 + $0x78] sm:$0xff]
    %v2339 = vld [vmem:[#allocation6 + $0x80] sm:$0xff]
    %v2340 = vld [vmem:[#allocation6 + $0x88] sm:$0xff]
    %v2341 = vld [vmem:[#allocation6 + $0x90] sm:$0xff]
    %v2342 = vld [vmem:[#allocation6 + $0x98] sm:$0xff]
    %v2343 = vld [vmem:[#allocation6 + $0xa0] sm:$0xff]
    %v2344 = vld [vmem:[#allocation6 + $0xa8] sm:$0xff]
    %v2345 = vld [vmem:[#allocation6 + $0xb0] sm:$0xff]
    %v2346 = vld [vmem:[#allocation6 + $0xb8] sm:$0xff]
    %v2347 = vld [vmem:[#allocation6 + $0xc0] sm:$0xff]
    %v2348 = vld [vmem:[#allocation6 + $0xc8] sm:$0xff]
    %v2349 = vld [vmem:[#allocation6 + $0xd0] sm:$0xff]
    %v2350 = vld [vmem:[#allocation6 + $0xd8] sm:$0xff]
    %v2351 = vld [vmem:[#allocation6 + $0xe0] sm:$0xff]
    %v2352 = vld [vmem:[#allocation6 + $0xe8] sm:$0xff]
    %v2353 = vld [vmem:[#allocation6 + $0xf0] sm:$0xff]
    %v2354 = vld [vmem:[#allocation6 + $0xf8] sm:$0xff]
    %v2355 = vld [vmem:[#allocation6 + $0x100] sm:$0xff]
    %v2356 = vld [vmem:[#allocation6 + $0x108] sm:$0xff]
    %v2357 = vld [vmem:[#allocation6 + $0x110] sm:$0xff]
    %v2358 = vld [vmem:[#allocation6 + $0x118] sm:$0xff]
    %v2359 = vld [vmem:[#allocation6 + $0x120] sm:$0xff]
    %v2360 = vld [vmem:[#allocation6 + $0x128] sm:$0xff]
    %v2361 = vld [vmem:[#allocation6 + $0x130] sm:$0xff]
    %v2362 = vld [vmem:[#allocation6 + $0x138] sm:$0xff]
    %v2363 = vld [vmem:[#allocation6 + $0x140] sm:$0xff]
    %v2364 = vld [vmem:[#allocation6 + $0x148] sm:$0xff]
    %v2365 = vld [vmem:[#allocation6 + $0x150] sm:$0xff]
    %v2366 = vld [vmem:[#allocation6 + $0x158] sm:$0xff]
    %v2367 = vld [vmem:[#allocation6 + $0x160] sm:$0xff]
    %v2368 = vld [vmem:[#allocation6 + $0x168] sm:$0xff]
    %v2369 = vld [vmem:[#allocation6 + $0x170] sm:$0xff]
    %v2370 = vld [vmem:[#allocation6 + $0x178] sm:$0xff]
    %v2371 = vld [vmem:[#allocation6 + $0x180] sm:$0xff]
    %v2372 = vld [vmem:[#allocation6 + $0x188] sm:$0xff]
    %v2373 = vld [vmem:[#allocation6 + $0x190] sm:$0xff]
    %v2374 = vld [vmem:[#allocation6 + $0x198] sm:$0xff]
    %v2375 = vld [vmem:[#allocation6 + $0x1a0] sm:$0xff]
    %v2376 = vld [vmem:[#allocation6 + $0x1a8] sm:$0xff]
    %v2377 = vld [vmem:[#allocation6 + $0x1b0] sm:$0xff]
    %v2378 = vld [vmem:[#allocation6 + $0x1b8] sm:$0xff]
    %v2379 = vld [vmem:[#allocation6 + $0x1c0] sm:$0xff]
    %v2380 = vld [vmem:[#allocation6 + $0x1c8] sm:$0xff]
    %v2381 = vld [vmem:[#allocation6 + $0x1d0] sm:$0xff]
    %v2382 = vld [vmem:[#allocation6 + $0x1d8] sm:$0xff]
    %v2383 = vld [vmem:[#allocation6 + $0x1e0] sm:$0xff]
    %v2384 = vld [vmem:[#allocation6 + $0x1e8] sm:$0xff]
    %v2385 = vld [vmem:[#allocation6 + $0x1f0] sm:$0xff]
    %v2386 = vld [vmem:[#allocation6 + $0x1f8] sm:$0xff]
    %v2387 = vld [vmem:[#allocation6 + $0x200] sm:$0xff]
    %v2388 = vld [vmem:[#allocation6 + $0x208] sm:$0xff]
    %v2389 = vld [vmem:[#allocation6 + $0x210] sm:$0xff]
    %v2390 = vld [vmem:[#allocation6 + $0x218] sm:$0xff]
    %v2391 = vld [vmem:[#allocation6 + $0x220] sm:$0xff]
    %v2392 = vld [vmem:[#allocation6 + $0x228] sm:$0xff]
    %v2393 = vld [vmem:[#allocation6 + $0x230] sm:$0xff]
    %v2394 = vld [vmem:[#allocation6 + $0x238] sm:$0xff]
    %v2395 = vld [vmem:[#allocation6 + $0x240] sm:$0xff]
    %v2396 = vld [vmem:[#allocation6 + $0x248] sm:$0xff]
    %v2397 = vld [vmem:[#allocation6 + $0x250] sm:$0xff]
    %v2398 = vld [vmem:[#allocation6 + $0x258] sm:$0xff]
    %v2399 = vld [vmem:[#allocation6 + $0x260] sm:$0xff]
    %v2400 = vld [vmem:[#allocation6 + $0x268] sm:$0xff]
    %v2401 = vld [vmem:[#allocation6 + $0x270] sm:$0xff]
    %v2402 = vld [vmem:[#allocation6 + $0x278] sm:$0xff]
    %v2403 = vld [vmem:[#allocation6 + $0x280] sm:$0xff]
    %v2404 = vld [vmem:[#allocation6 + $0x288] sm:$0xff]
    %v2405 = vld [vmem:[#allocation6 + $0x290] sm:$0xff]
    %v2406 = vld [vmem:[#allocation6 + $0x298] sm:$0xff]
    %v2407 = vld [vmem:[#allocation6 + $0x2a0] sm:$0xff]
    %v2408 = vld [vmem:[#allocation6 + $0x2a8] sm:$0xff]
    %v2409 = vld [vmem:[#allocation6 + $0x2b0] sm:$0xff]
    %v2410 = vld [vmem:[#allocation6 + $0x2b8] sm:$0xff]
    %v2411 = vld [vmem:[#allocation6 + $0x2c0] sm:$0xff]
    %v2412 = vld [vmem:[#allocation6 + $0x2c8] sm:$0xff]
    %v2413 = vld [vmem:[#allocation6 + $0x2d0] sm:$0xff]
    %v2414 = vld [vmem:[#allocation6 + $0x2d8] sm:$0xff]
    %v2415 = vld [vmem:[#allocation6 + $0x2e0] sm:$0xff]
    %v2416 = vld [vmem:[#allocation6 + $0x2e8] sm:$0xff]
    %v2417 = vld [vmem:[#allocation6 + $0x2f0] sm:$0xff]
    %v2418 = vld [vmem:[#allocation6 + $0x2f8] sm:$0xff]
    %v2419 = vld [vmem:[#allocation6 + $0x300] sm:$0xff]
    %v2420 = vld [vmem:[#allocation6 + $0x308] sm:$0xff]
    %v2421 = vld [vmem:[#allocation6 + $0x310] sm:$0xff]
    %v2422 = vld [vmem:[#allocation6 + $0x318] sm:$0xff]
    %v2423 = vld [vmem:[#allocation6 + $0x320] sm:$0xff]
    %v2424 = vld [vmem:[#allocation6 + $0x328] sm:$0xff]
    %v2425 = vld [vmem:[#allocation6 + $0x330] sm:$0xff]
    %v2426 = vld [vmem:[#allocation6 + $0x338] sm:$0xff]
    %v2427 = vld [vmem:[#allocation6 + $0x340] sm:$0xff]
    %v2428 = vld [vmem:[#allocation6 + $0x348] sm:$0xff]
    %v2429 = vld [vmem:[#allocation6 + $0x350] sm:$0xff]
    %v2430 = vld [vmem:[#allocation6 + $0x358] sm:$0xff]
    %v2431 = vld [vmem:[#allocation6 + $0x360] sm:$0xff]
    %v2432 = vld [vmem:[#allocation6 + $0x368] sm:$0xff]
    %v2433 = vld [vmem:[#allocation6 + $0x370] sm:$0xff]
    %v2434 = vld [vmem:[#allocation6 + $0x378] sm:$0xff]
    %v2435 = vld [vmem:[#allocation6 + $0x380] sm:$0xff]
    %v2436 = vld [vmem:[#allocation6 + $0x388] sm:$0xff]
    %v2437 = vld [vmem:[#allocation6 + $0x390] sm:$0xff]
    %v2438 = vld [vmem:[#allocation6 + $0x398] sm:$0xff]
    %v2439 = vld [vmem:[#allocation6 + $0x3a0] sm:$0xff]
    %v2440 = vld [vmem:[#allocation6 + $0x3a8] sm:$0xff]
    %v2441 = vld [vmem:[#allocation6 + $0x3b0] sm:$0xff]
    %v2442 = vld [vmem:[#allocation6 + $0x3b8] sm:$0xff]
    %v2443 = vld [vmem:[#allocation6 + $0x3c0] sm:$0xff]
    %v2444 = vld [vmem:[#allocation6 + $0x3c8] sm:$0xff]
    %v2445 = vld [vmem:[#allocation6 + $0x3d0] sm:$0xff]
    %v2446 = vld [vmem:[#allocation6 + $0x3d8] sm:$0xff]
    %v2447 = vld [vmem:[#allocation6 + $0x3e0] sm:$0xff]
    %v2448 = vld [vmem:[#allocation6 + $0x3e8] sm:$0xff]
    %v2449 = vld [vmem:[#allocation6 + $0x3f0] sm:$0xff]
    %v2450 = vld [vmem:[#allocation6 + $0x3f8] sm:$0xff]
    %v2451 = vld [vmem:[%s6] sm:$0xf]
    %v2453 = vlaneseq
    %v2454 = vshrl.u32 %v2453, 7
    %v2455 = vsub.s32 0, %v2454
    %v2456 = vrot.slane %v2451, %v2455
    %v2457 = vlaneseq
    %v2458 = vshrl.u32 %v2457, 7
    %v2459 = vsub.s32 1, %v2458
    %v2460 = vrot.slane %v2451, %v2459
    %v2461 = vlaneseq
    %v2462 = vshrl.u32 %v2461, 7
    %v2463 = vsub.s32 2, %v2462
    %v2464 = vrot.slane %v2451, %v2463
    %v2465 = vlaneseq
    %v2466 = vshrl.u32 %v2465, 7
    %v2467 = vsub.s32 3, %v2466
    %v2468 = vrot.slane %v2451, %v2467
    %v2601 = vunpack.c.l.b16 %v2323
    %v2602 = vunpack.c.h.b16 %v2323
    %v2603 = vunpack.c.l.b16 %v2324
    %v2604 = vunpack.c.h.b16 %v2324
    %v2605 = vunpack.c.l.b16 %v2325
    %v2606 = vunpack.c.h.b16 %v2325
    %v2607 = vunpack.c.l.b16 %v2326
    %v2608 = vunpack.c.h.b16 %v2326
    %v2609 = vunpack.c.l.b16 %v2327
    %v2610 = vunpack.c.h.b16 %v2327
    %v2611 = vunpack.c.l.b16 %v2328
    %v2612 = vunpack.c.h.b16 %v2328
    %v2613 = vunpack.c.l.b16 %v2329
    %v2614 = vunpack.c.h.b16 %v2329
    %v2615 = vunpack.c.l.b16 %v2330
    %v2616 = vunpack.c.h.b16 %v2330
    %v2617 = vunpack.c.l.b16 %v2331
    %v2618 = vunpack.c.h.b16 %v2331
    %v2619 = vunpack.c.l.b16 %v2332
    %v2620 = vunpack.c.h.b16 %v2332
    %v2621 = vunpack.c.l.b16 %v2333
    %v2622 = vunpack.c.h.b16 %v2333
    %v2623 = vunpack.c.l.b16 %v2334
    %v2624 = vunpack.c.h.b16 %v2334
    %v2625 = vunpack.c.l.b16 %v2335
    %v2626 = vunpack.c.h.b16 %v2335
    %v2627 = vunpack.c.l.b16 %v2336
    %v2628 = vunpack.c.h.b16 %v2336
    %v2629 = vunpack.c.l.b16 %v2337
    %v2630 = vunpack.c.h.b16 %v2337
    %v2631 = vunpack.c.l.b16 %v2338
    %v2632 = vunpack.c.h.b16 %v2338
    %v2633 = vunpack.c.l.b16 %v2339
    %v2634 = vunpack.c.h.b16 %v2339
    %v2635 = vunpack.c.l.b16 %v2340
    %v2636 = vunpack.c.h.b16 %v2340
    %v2637 = vunpack.c.l.b16 %v2341
    %v2638 = vunpack.c.h.b16 %v2341
    %v2639 = vunpack.c.l.b16 %v2342
    %v2640 = vunpack.c.h.b16 %v2342
    %v2641 = vunpack.c.l.b16 %v2343
    %v2642 = vunpack.c.h.b16 %v2343
    %v2643 = vunpack.c.l.b16 %v2344
    %v2644 = vunpack.c.h.b16 %v2344
    %v2645 = vunpack.c.l.b16 %v2345
    %v2646 = vunpack.c.h.b16 %v2345
    %v2647 = vunpack.c.l.b16 %v2346
    %v2648 = vunpack.c.h.b16 %v2346
    %v2649 = vunpack.c.l.b16 %v2347
    %v2650 = vunpack.c.h.b16 %v2347
    %v2651 = vunpack.c.l.b16 %v2348
    %v2652 = vunpack.c.h.b16 %v2348
    %v2653 = vunpack.c.l.b16 %v2349
    %v2654 = vunpack.c.h.b16 %v2349
    %v2655 = vunpack.c.l.b16 %v2350
    %v2656 = vunpack.c.h.b16 %v2350
    %v2657 = vunpack.c.l.b16 %v2351
    %v2658 = vunpack.c.h.b16 %v2351
    %v2659 = vunpack.c.l.b16 %v2352
    %v2660 = vunpack.c.h.b16 %v2352
    %v2661 = vunpack.c.l.b16 %v2353
    %v2662 = vunpack.c.h.b16 %v2353
    %v2663 = vunpack.c.l.b16 %v2354
    %v2664 = vunpack.c.h.b16 %v2354
    %v2665 = vunpack.c.l.b16 %v2355
    %v2666 = vunpack.c.h.b16 %v2355
    %v2667 = vunpack.c.l.b16 %v2356
    %v2668 = vunpack.c.h.b16 %v2356
    %v2669 = vunpack.c.l.b16 %v2357
    %v2670 = vunpack.c.h.b16 %v2357
    %v2671 = vunpack.c.l.b16 %v2358
    %v2672 = vunpack.c.h.b16 %v2358
    %v2673 = vunpack.c.l.b16 %v2359
    %v2674 = vunpack.c.h.b16 %v2359
    %v2675 = vunpack.c.l.b16 %v2360
    %v2676 = vunpack.c.h.b16 %v2360
    %v2677 = vunpack.c.l.b16 %v2361
    %v2678 = vunpack.c.h.b16 %v2361
    %v2679 = vunpack.c.l.b16 %v2362
    %v2680 = vunpack.c.h.b16 %v2362
    %v2681 = vunpack.c.l.b16 %v2363
    %v2682 = vunpack.c.h.b16 %v2363
    %v2683 = vunpack.c.l.b16 %v2364
    %v2684 = vunpack.c.h.b16 %v2364
    %v2685 = vunpack.c.l.b16 %v2365
    %v2686 = vunpack.c.h.b16 %v2365
    %v2687 = vunpack.c.l.b16 %v2366
    %v2688 = vunpack.c.h.b16 %v2366
    %v2689 = vunpack.c.l.b16 %v2367
    %v2690 = vunpack.c.h.b16 %v2367
    %v2691 = vunpack.c.l.b16 %v2368
    %v2692 = vunpack.c.h.b16 %v2368
    %v2693 = vunpack.c.l.b16 %v2369
    %v2694 = vunpack.c.h.b16 %v2369
    %v2695 = vunpack.c.l.b16 %v2370
    %v2696 = vunpack.c.h.b16 %v2370
    %v2697 = vunpack.c.l.b16 %v2371
    %v2698 = vunpack.c.h.b16 %v2371
    %v2699 = vunpack.c.l.b16 %v2372
    %v2700 = vunpack.c.h.b16 %v2372
    %v2701 = vunpack.c.l.b16 %v2373
    %v2702 = vunpack.c.h.b16 %v2373
    %v2703 = vunpack.c.l.b16 %v2374
    %v2704 = vunpack.c.h.b16 %v2374
    %v2705 = vunpack.c.l.b16 %v2375
    %v2706 = vunpack.c.h.b16 %v2375
    %v2707 = vunpack.c.l.b16 %v2376
    %v2708 = vunpack.c.h.b16 %v2376
    %v2709 = vunpack.c.l.b16 %v2377
    %v2710 = vunpack.c.h.b16 %v2377
    %v2711 = vunpack.c.l.b16 %v2378
    %v2712 = vunpack.c.h.b16 %v2378
    %v2713 = vunpack.c.l.b16 %v2379
    %v2714 = vunpack.c.h.b16 %v2379
    %v2715 = vunpack.c.l.b16 %v2380
    %v2716 = vunpack.c.h.b16 %v2380
    %v2717 = vunpack.c.l.b16 %v2381
    %v2718 = vunpack.c.h.b16 %v2381
    %v2719 = vunpack.c.l.b16 %v2382
    %v2720 = vunpack.c.h.b16 %v2382
    %v2721 = vunpack.c.l.b16 %v2383
    %v2722 = vunpack.c.h.b16 %v2383
    %v2723 = vunpack.c.l.b16 %v2384
    %v2724 = vunpack.c.h.b16 %v2384
    %v2725 = vunpack.c.l.b16 %v2385
    %v2726 = vunpack.c.h.b16 %v2385
    %v2727 = vunpack.c.l.b16 %v2386
    %v2728 = vunpack.c.h.b16 %v2386
    %v2729 = vunpack.c.l.b16 %v2387
    %v2730 = vunpack.c.h.b16 %v2387
    %v2731 = vunpack.c.l.b16 %v2388
    %v2732 = vunpack.c.h.b16 %v2388
    %v2733 = vunpack.c.l.b16 %v2389
    %v2734 = vunpack.c.h.b16 %v2389
    %v2735 = vunpack.c.l.b16 %v2390
    %v2736 = vunpack.c.h.b16 %v2390
    %v2737 = vunpack.c.l.b16 %v2391
    %v2738 = vunpack.c.h.b16 %v2391
    %v2739 = vunpack.c.l.b16 %v2392
    %v2740 = vunpack.c.h.b16 %v2392
    %v2741 = vunpack.c.l.b16 %v2393
    %v2742 = vunpack.c.h.b16 %v2393
    %v2743 = vunpack.c.l.b16 %v2394
    %v2744 = vunpack.c.h.b16 %v2394
    %v2745 = vunpack.c.l.b16 %v2395
    %v2746 = vunpack.c.h.b16 %v2395
    %v2747 = vunpack.c.l.b16 %v2396
    %v2748 = vunpack.c.h.b16 %v2396
    %v2749 = vunpack.c.l.b16 %v2397
    %v2750 = vunpack.c.h.b16 %v2397
    %v2751 = vunpack.c.l.b16 %v2398
    %v2752 = vunpack.c.h.b16 %v2398
    %v2753 = vunpack.c.l.b16 %v2399
    %v2754 = vunpack.c.h.b16 %v2399
    %v2755 = vunpack.c.l.b16 %v2400
    %v2756 = vunpack.c.h.b16 %v2400
    %v2757 = vunpack.c.l.b16 %v2401
    %v2758 = vunpack.c.h.b16 %v2401
    %v2759 = vunpack.c.l.b16 %v2402
    %v2760 = vunpack.c.h.b16 %v2402
    %v2761 = vunpack.c.l.b16 %v2403
    %v2762 = vunpack.c.h.b16 %v2403
    %v2763 = vunpack.c.l.b16 %v2404
    %v2764 = vunpack.c.h.b16 %v2404
    %v2765 = vunpack.c.l.b16 %v2405
    %v2766 = vunpack.c.h.b16 %v2405
    %v2767 = vunpack.c.l.b16 %v2406
    %v2768 = vunpack.c.h.b16 %v2406
    %v2769 = vunpack.c.l.b16 %v2407
    %v2770 = vunpack.c.h.b16 %v2407
    %v2771 = vunpack.c.l.b16 %v2408
    %v2772 = vunpack.c.h.b16 %v2408
    %v2773 = vunpack.c.l.b16 %v2409
    %v2774 = vunpack.c.h.b16 %v2409
    %v2775 = vunpack.c.l.b16 %v2410
    %v2776 = vunpack.c.h.b16 %v2410
    %v2777 = vunpack.c.l.b16 %v2411
    %v2778 = vunpack.c.h.b16 %v2411
    %v2779 = vunpack.c.l.b16 %v2412
    %v2780 = vunpack.c.h.b16 %v2412
    %v2781 = vunpack.c.l.b16 %v2413
    %v2782 = vunpack.c.h.b16 %v2413
    %v2783 = vunpack.c.l.b16 %v2414
    %v2784 = vunpack.c.h.b16 %v2414
    %v2785 = vunpack.c.l.b16 %v2415
    %v2786 = vunpack.c.h.b16 %v2415
    %v2787 = vunpack.c.l.b16 %v2416
    %v2788 = vunpack.c.h.b16 %v2416
    %v2789 = vunpack.c.l.b16 %v2417
    %v2790 = vunpack.c.h.b16 %v2417
    %v2791 = vunpack.c.l.b16 %v2418
    %v2792 = vunpack.c.h.b16 %v2418
    %v2793 = vunpack.c.l.b16 %v2419
    %v2794 = vunpack.c.h.b16 %v2419
    %v2795 = vunpack.c.l.b16 %v2420
    %v2796 = vunpack.c.h.b16 %v2420
    %v2797 = vunpack.c.l.b16 %v2421
    %v2798 = vunpack.c.h.b16 %v2421
    %v2799 = vunpack.c.l.b16 %v2422
    %v2800 = vunpack.c.h.b16 %v2422
    %v2801 = vunpack.c.l.b16 %v2423
    %v2802 = vunpack.c.h.b16 %v2423
    %v2803 = vunpack.c.l.b16 %v2424
    %v2804 = vunpack.c.h.b16 %v2424
    %v2805 = vunpack.c.l.b16 %v2425
    %v2806 = vunpack.c.h.b16 %v2425
    %v2807 = vunpack.c.l.b16 %v2426
    %v2808 = vunpack.c.h.b16 %v2426
    %v2809 = vunpack.c.l.b16 %v2427
    %v2810 = vunpack.c.h.b16 %v2427
    %v2811 = vunpack.c.l.b16 %v2428
    %v2812 = vunpack.c.h.b16 %v2428
    %v2813 = vunpack.c.l.b16 %v2429
    %v2814 = vunpack.c.h.b16 %v2429
    %v2815 = vunpack.c.l.b16 %v2430
    %v2816 = vunpack.c.h.b16 %v2430
    %v2817 = vunpack.c.l.b16 %v2431
    %v2818 = vunpack.c.h.b16 %v2431
    %v2819 = vunpack.c.l.b16 %v2432
    %v2820 = vunpack.c.h.b16 %v2432
    %v2821 = vunpack.c.l.b16 %v2433
    %v2822 = vunpack.c.h.b16 %v2433
    %v2823 = vunpack.c.l.b16 %v2434
    %v2824 = vunpack.c.h.b16 %v2434
    %v2825 = vunpack.c.l.b16 %v2435
    %v2826 = vunpack.c.h.b16 %v2435
    %v2827 = vunpack.c.l.b16 %v2436
    %v2828 = vunpack.c.h.b16 %v2436
    %v2829 = vunpack.c.l.b16 %v2437
    %v2830 = vunpack.c.h.b16 %v2437
    %v2831 = vunpack.c.l.b16 %v2438
    %v2832 = vunpack.c.h.b16 %v2438
    %v2833 = vunpack.c.l.b16 %v2439
    %v2834 = vunpack.c.h.b16 %v2439
    %v2835 = vunpack.c.l.b16 %v2440
    %v2836 = vunpack.c.h.b16 %v2440
    %v2837 = vunpack.c.l.b16 %v2441
    %v2838 = vunpack.c.h.b16 %v2441
    %v2839 = vunpack.c.l.b16 %v2442
    %v2840 = vunpack.c.h.b16 %v2442
    %v2841 = vunpack.c.l.b16 %v2443
    %v2842 = vunpack.c.h.b16 %v2443
    %v2843 = vunpack.c.l.b16 %v2444
    %v2844 = vunpack.c.h.b16 %v2444
    %v2845 = vunpack.c.l.b16 %v2445
    %v2846 = vunpack.c.h.b16 %v2445
    %v2847 = vunpack.c.l.b16 %v2446
    %v2848 = vunpack.c.h.b16 %v2446
    %v2849 = vunpack.c.l.b16 %v2447
    %v2850 = vunpack.c.h.b16 %v2447
    %v2851 = vunpack.c.l.b16 %v2448
    %v2852 = vunpack.c.h.b16 %v2448
    %v2853 = vunpack.c.l.b16 %v2449
    %v2854 = vunpack.c.h.b16 %v2449
    %v2855 = vunpack.c.l.b16 %v2450
    %v2856 = vunpack.c.h.b16 %v2450
    %v2857 = vpack.c.b16 %v2605, %v2601
    %v2858 = vpack.c.b16 %v2606, %v2602
    %v2859 = vpack.c.b16 %v2607, %v2603
    %v2860 = vpack.c.b16 %v2608, %v2604
    %v2861 = vpack.c.b16 %v2613, %v2609
    %v2862 = vpack.c.b16 %v2614, %v2610
    %v2863 = vpack.c.b16 %v2615, %v2611
    %v2864 = vpack.c.b16 %v2616, %v2612
    %v2865 = vpack.c.b16 %v2621, %v2617
    %v2866 = vpack.c.b16 %v2622, %v2618
    %v2867 = vpack.c.b16 %v2623, %v2619
    %v2868 = vpack.c.b16 %v2624, %v2620
    %v2869 = vpack.c.b16 %v2629, %v2625
    %v2870 = vpack.c.b16 %v2630, %v2626
    %v2871 = vpack.c.b16 %v2631, %v2627
    %v2872 = vpack.c.b16 %v2632, %v2628
    %v2873 = vpack.c.b16 %v2637, %v2633
    %v2874 = vpack.c.b16 %v2638, %v2634
    %v2875 = vpack.c.b16 %v2639, %v2635
    %v2876 = vpack.c.b16 %v2640, %v2636
    %v2877 = vpack.c.b16 %v2645, %v2641
    %v2878 = vpack.c.b16 %v2646, %v2642
    %v2879 = vpack.c.b16 %v2647, %v2643
    %v2880 = vpack.c.b16 %v2648, %v2644
    %v2881 = vpack.c.b16 %v2653, %v2649
    %v2882 = vpack.c.b16 %v2654, %v2650
    %v2883 = vpack.c.b16 %v2655, %v2651
    %v2884 = vpack.c.b16 %v2656, %v2652
    %v2885 = vpack.c.b16 %v2661, %v2657
    %v2886 = vpack.c.b16 %v2662, %v2658
    %v2887 = vpack.c.b16 %v2663, %v2659
    %v2888 = vpack.c.b16 %v2664, %v2660
    %v2889 = vpack.c.b16 %v2669, %v2665
    %v2890 = vpack.c.b16 %v2670, %v2666
    %v2891 = vpack.c.b16 %v2671, %v2667
    %v2892 = vpack.c.b16 %v2672, %v2668
    %v2893 = vpack.c.b16 %v2677, %v2673
    %v2894 = vpack.c.b16 %v2678, %v2674
    %v2895 = vpack.c.b16 %v2679, %v2675
    %v2896 = vpack.c.b16 %v2680, %v2676
    %v2897 = vpack.c.b16 %v2685, %v2681
    %v2898 = vpack.c.b16 %v2686, %v2682
    %v2899 = vpack.c.b16 %v2687, %v2683
    %v2900 = vpack.c.b16 %v2688, %v2684
    %v2901 = vpack.c.b16 %v2693, %v2689
    %v2902 = vpack.c.b16 %v2694, %v2690
    %v2903 = vpack.c.b16 %v2695, %v2691
    %v2904 = vpack.c.b16 %v2696, %v2692
    %v2905 = vpack.c.b16 %v2701, %v2697
    %v2906 = vpack.c.b16 %v2702, %v2698
    %v2907 = vpack.c.b16 %v2703, %v2699
    %v2908 = vpack.c.b16 %v2704, %v2700
    %v2909 = vpack.c.b16 %v2709, %v2705
    %v2910 = vpack.c.b16 %v2710, %v2706
    %v2911 = vpack.c.b16 %v2711, %v2707
    %v2912 = vpack.c.b16 %v2712, %v2708
    %v2913 = vpack.c.b16 %v2717, %v2713
    %v2914 = vpack.c.b16 %v2718, %v2714
    %v2915 = vpack.c.b16 %v2719, %v2715
    %v2916 = vpack.c.b16 %v2720, %v2716
    %v2917 = vpack.c.b16 %v2725, %v2721
    %v2918 = vpack.c.b16 %v2726, %v2722
    %v2919 = vpack.c.b16 %v2727, %v2723
    %v2920 = vpack.c.b16 %v2728, %v2724
    %v2921 = vpack.c.b16 %v2733, %v2729
    %v2922 = vpack.c.b16 %v2734, %v2730
    %v2923 = vpack.c.b16 %v2735, %v2731
    %v2924 = vpack.c.b16 %v2736, %v2732
    %v2925 = vpack.c.b16 %v2741, %v2737
    %v2926 = vpack.c.b16 %v2742, %v2738
    %v2927 = vpack.c.b16 %v2743, %v2739
    %v2928 = vpack.c.b16 %v2744, %v2740
    %v2929 = vpack.c.b16 %v2749, %v2745
    %v2930 = vpack.c.b16 %v2750, %v2746
    %v2931 = vpack.c.b16 %v2751, %v2747
    %v2932 = vpack.c.b16 %v2752, %v2748
    %v2933 = vpack.c.b16 %v2757, %v2753
    %v2934 = vpack.c.b16 %v2758, %v2754
    %v2935 = vpack.c.b16 %v2759, %v2755
    %v2936 = vpack.c.b16 %v2760, %v2756
    %v2937 = vpack.c.b16 %v2765, %v2761
    %v2938 = vpack.c.b16 %v2766, %v2762
    %v2939 = vpack.c.b16 %v2767, %v2763
    %v2940 = vpack.c.b16 %v2768, %v2764
    %v2941 = vpack.c.b16 %v2773, %v2769
    %v2942 = vpack.c.b16 %v2774, %v2770
    %v2943 = vpack.c.b16 %v2775, %v2771
    %v2944 = vpack.c.b16 %v2776, %v2772
    %v2945 = vpack.c.b16 %v2781, %v2777
    %v2946 = vpack.c.b16 %v2782, %v2778
    %v2947 = vpack.c.b16 %v2783, %v2779
    %v2948 = vpack.c.b16 %v2784, %v2780
    %v2949 = vpack.c.b16 %v2789, %v2785
    %v2950 = vpack.c.b16 %v2790, %v2786
    %v2951 = vpack.c.b16 %v2791, %v2787
    %v2952 = vpack.c.b16 %v2792, %v2788
    %v2953 = vpack.c.b16 %v2797, %v2793
    %v2954 = vpack.c.b16 %v2798, %v2794
    %v2955 = vpack.c.b16 %v2799, %v2795
    %v2956 = vpack.c.b16 %v2800, %v2796
    %v2957 = vpack.c.b16 %v2805, %v2801
    %v2958 = vpack.c.b16 %v2806, %v2802
    %v2959 = vpack.c.b16 %v2807, %v2803
    %v2960 = vpack.c.b16 %v2808, %v2804
    %v2961 = vpack.c.b16 %v2813, %v2809
    %v2962 = vpack.c.b16 %v2814, %v2810
    %v2963 = vpack.c.b16 %v2815, %v2811
    %v2964 = vpack.c.b16 %v2816, %v2812
    %v2965 = vpack.c.b16 %v2821, %v2817
    %v2966 = vpack.c.b16 %v2822, %v2818
    %v2967 = vpack.c.b16 %v2823, %v2819
    %v2968 = vpack.c.b16 %v2824, %v2820
    %v2969 = vpack.c.b16 %v2829, %v2825
    %v2970 = vpack.c.b16 %v2830, %v2826
    %v2971 = vpack.c.b16 %v2831, %v2827
    %v2972 = vpack.c.b16 %v2832, %v2828
    %v2973 = vpack.c.b16 %v2837, %v2833
    %v2974 = vpack.c.b16 %v2838, %v2834
    %v2975 = vpack.c.b16 %v2839, %v2835
    %v2976 = vpack.c.b16 %v2840, %v2836
    %v2977 = vpack.c.b16 %v2845, %v2841
    %v2978 = vpack.c.b16 %v2846, %v2842
    %v2979 = vpack.c.b16 %v2847, %v2843
    %v2980 = vpack.c.b16 %v2848, %v2844
    %v2981 = vpack.c.b16 %v2853, %v2849
    %v2982 = vpack.c.b16 %v2854, %v2850
    %v2983 = vpack.c.b16 %v2855, %v2851
    %v2984 = vpack.c.b16 %v2856, %v2852
    %3113 = vmatprep.subr.bf16.mxu0 %v2886
    %3114 = vmatpush1.bf16.msra.mxu0 %v2885
    %3115 = vmatprep.subr.bf16.mxu0 %v2882
    %3116 = vmatpush1.bf16.msra.mxu0 %v2881
    %3117 = vmatprep.subr.bf16.mxu0 %v2878
    %3118 = vmatpush1.bf16.msra.mxu0 %v2877
    %3119 = vmatprep.subr.bf16.mxu0 %v2874
    %3120 = vmatpush1.bf16.msra.mxu0 %v2873
    %3121 = vmatprep.subr.bf16.mxu0 %v2870
    %3122 = vmatpush1.bf16.msra.mxu0 %v2869
    %3123 = vmatprep.subr.bf16.mxu0 %v2866
    %3124 = vmatpush1.bf16.msra.mxu0 %v2865
    %3125 = vmatprep.subr.bf16.mxu0 %v2862
    %3126 = vmatpush1.bf16.msra.mxu0 %v2861
    %3127 = vmatprep.subr.bf16.mxu0 %v2858
    %3128 = vmatpush1.bf16.msra.mxu0 %v2857
    %3129 = vmatprep.subr.bf16.mxu0 %v2918
    %3130 = vmatpush2.bf16.msra.mxu0 %v2917
    %3131 = vmatprep.subr.bf16.mxu0 %v2914
    %3132 = vmatpush2.bf16.msra.mxu0 %v2913
    %3133 = vmatprep.subr.bf16.mxu0 %v2910
    %3134 = vmatpush2.bf16.msra.mxu0 %v2909
    %3135 = vmatprep.subr.bf16.mxu0 %v2906
    %3136 = vmatpush2.bf16.msra.mxu0 %v2905
    %3137 = vmatprep.subr.bf16.mxu0 %v2902
    %3138 = vmatpush2.bf16.msra.mxu0 %v2901
    %3139 = vmatprep.subr.bf16.mxu0 %v2898
    %3140 = vmatpush2.bf16.msra.mxu0 %v2897
    %3141 = vmatprep.subr.bf16.mxu0 %v2894
    %3142 = vmatpush2.bf16.msra.mxu0 %v2893
    %3143 = vmatprep.subr.bf16.mxu0 %v2890
    %3144 = vmatpush2.bf16.msra.mxu0 %v2889
    %3145 = vmatprep.mubr.bf16.mxu0 %v2320
    %3146 = vmatmul.mubr.bf16.gmra.mxu0 %v2319
    %v3147 = vpop.f32.mrf.mxu0
    %v3148 = vadd.f32 %v2456, %v3147
    %v3149 = vpop.f32.mrf.mxu0
    %v3150 = vadd.f32 %v2460, %v3149
    %v3151 = vpop.f32.mrf.mxu0
    %v3152 = vadd.f32 %v2456, %v3151
    %v3153 = vpop.f32.mrf.mxu0
    %v3154 = vadd.f32 %v2460, %v3153
    %3155 = vdwg.mxu0
    %3156 = vmatprep.subr.bf16.mxu0 %v2950
    %3157 = vmatpush1.bf16.msra.mxu0 %v2949
    %3158 = vmatprep.subr.bf16.mxu0 %v2946
    %3159 = vmatpush1.bf16.msra.mxu0 %v2945
    %3160 = vmatprep.subr.bf16.mxu0 %v2942
    %3161 = vmatpush1.bf16.msra.mxu0 %v2941
    %3162 = vmatprep.subr.bf16.mxu0 %v2938
    %3163 = vmatpush1.bf16.msra.mxu0 %v2937
    %3164 = vmatprep.subr.bf16.mxu0 %v2934
    %3165 = vmatpush1.bf16.msra.mxu0 %v2933
    %3166 = vmatprep.subr.bf16.mxu0 %v2930
    %3167 = vmatpush1.bf16.msra.mxu0 %v2929
    %3168 = vmatprep.subr.bf16.mxu0 %v2926
    %3169 = vmatpush1.bf16.msra.mxu0 %v2925
    %3170 = vmatprep.subr.bf16.mxu0 %v2922
    %3171 = vmatpush1.bf16.msra.mxu0 %v2921
    %3172 = vmatprep.subr.bf16.mxu0 %v2982
    %3173 = vmatpush2.bf16.msra.mxu0 %v2981
    %3174 = vmatprep.subr.bf16.mxu0 %v2978
    %3175 = vmatpush2.bf16.msra.mxu0 %v2977
    %3176 = vmatprep.subr.bf16.mxu0 %v2974
    %3177 = vmatpush2.bf16.msra.mxu0 %v2973
    %3178 = vmatprep.subr.bf16.mxu0 %v2970
    %3179 = vmatpush2.bf16.msra.mxu0 %v2969
    %3180 = vmatprep.subr.bf16.mxu0 %v2966
    %3181 = vmatpush2.bf16.msra.mxu0 %v2965
    %3182 = vmatprep.subr.bf16.mxu0 %v2962
    %3183 = vmatpush2.bf16.msra.mxu0 %v2961
    %3184 = vmatprep.subr.bf16.mxu0 %v2958
    %3185 = vmatpush2.bf16.msra.mxu0 %v2957
    %3186 = vmatprep.subr.bf16.mxu0 %v2954
    %3187 = vmatpush2.bf16.msra.mxu0 %v2953
    %3188 = vmatprep.mubr.bf16.mxu0 %v2322
    %3189 = vmatmul.mubr.bf16.gmra.mxu0 %v2321
    %v3190 = vpop.f32.mrf.mxu0
    %v3191 = vadd.f32 %v3148, %v3190
    %v3192 = vpop.f32.mrf.mxu0
    %v3193 = vadd.f32 %v3150, %v3192
    %v3194 = vpop.f32.mrf.mxu0
    %v3195 = vadd.f32 %v3152, %v3194
    %v3196 = vpop.f32.mrf.mxu0
    %v3197 = vadd.f32 %v3154, %v3196
    %3198 = vdwg.mxu0
    %3199 = vmatprep.subr.bf16.mxu0 %v2888
    %3200 = vmatpush1.bf16.msra.mxu0 %v2887
    %3201 = vmatprep.subr.bf16.mxu0 %v2884
    %3202 = vmatpush1.bf16.msra.mxu0 %v2883
    %3203 = vmatprep.subr.bf16.mxu0 %v2880
    %3204 = vmatpush1.bf16.msra.mxu0 %v2879
    %3205 = vmatprep.subr.bf16.mxu0 %v2876
    %3206 = vmatpush1.bf16.msra.mxu0 %v2875
    %3207 = vmatprep.subr.bf16.mxu0 %v2872
    %3208 = vmatpush1.bf16.msra.mxu0 %v2871
    %3209 = vmatprep.subr.bf16.mxu0 %v2868
    %3210 = vmatpush1.bf16.msra.mxu0 %v2867
    %3211 = vmatprep.subr.bf16.mxu0 %v2864
    %3212 = vmatpush1.bf16.msra.mxu0 %v2863
    %3213 = vmatprep.subr.bf16.mxu0 %v2860
    %3214 = vmatpush1.bf16.msra.mxu0 %v2859
    %3215 = vmatprep.subr.bf16.mxu0 %v2920
    %3216 = vmatpush2.bf16.msra.mxu0 %v2919
    %3217 = vmatprep.subr.bf16.mxu0 %v2916
    %3218 = vmatpush2.bf16.msra.mxu0 %v2915
    %3219 = vmatprep.subr.bf16.mxu0 %v2912
    %3220 = vmatpush2.bf16.msra.mxu0 %v2911
    %3221 = vmatprep.subr.bf16.mxu0 %v2908
    %3222 = vmatpush2.bf16.msra.mxu0 %v2907
    %3223 = vmatprep.subr.bf16.mxu0 %v2904
    %3224 = vmatpush2.bf16.msra.mxu0 %v2903
    %3225 = vmatprep.subr.bf16.mxu0 %v2900
    %3226 = vmatpush2.bf16.msra.mxu0 %v2899
    %3227 = vmatprep.subr.bf16.mxu0 %v2896
    %3228 = vmatpush2.bf16.msra.mxu0 %v2895
    %3229 = vmatprep.subr.bf16.mxu0 %v2892
    %3230 = vmatpush2.bf16.msra.mxu0 %v2891
    %3231 = vmatprep.mubr.bf16.mxu0 %v2320
    %3232 = vmatmul.mubr.bf16.gmra.mxu0 %v2319
    %v3233 = vpop.f32.mrf.mxu0
    %v3234 = vadd.f32 %v2464, %v3233
    %v3235 = vpop.f32.mrf.mxu0
    %v3236 = vadd.f32 %v2468, %v3235
    %v3237 = vpop.f32.mrf.mxu0
    %v3238 = vadd.f32 %v2464, %v3237
    %v3239 = vpop.f32.mrf.mxu0
    %v3240 = vadd.f32 %v2468, %v3239
    %3241 = vdwg.mxu0
    %3242 = vmatprep.subr.bf16.mxu0 %v2952
    %3243 = vmatpush1.bf16.msra.mxu0 %v2951
    %3244 = vmatprep.subr.bf16.mxu0 %v2948
    %3245 = vmatpush1.bf16.msra.mxu0 %v2947
    %3246 = vmatprep.subr.bf16.mxu0 %v2944
    %3247 = vmatpush1.bf16.msra.mxu0 %v2943
    %3248 = vmatprep.subr.bf16.mxu0 %v2940
    %3249 = vmatpush1.bf16.msra.mxu0 %v2939
    %3250 = vmatprep.subr.bf16.mxu0 %v2936
    %3251 = vmatpush1.bf16.msra.mxu0 %v2935
    %3252 = vmatprep.subr.bf16.mxu0 %v2932
    %3253 = vmatpush1.bf16.msra.mxu0 %v2931
    %3254 = vmatprep.subr.bf16.mxu0 %v2928
    %3255 = vmatpush1.bf16.msra.mxu0 %v2927
    %3256 = vmatprep.subr.bf16.mxu0 %v2924
    %3257 = vmatpush1.bf16.msra.mxu0 %v2923
    %3258 = vmatprep.subr.bf16.mxu0 %v2984
    %3259 = vmatpush2.bf16.msra.mxu0 %v2983
    %3260 = vmatprep.subr.bf16.mxu0 %v2980
    %3261 = vmatpush2.bf16.msra.mxu0 %v2979
    %3262 = vmatprep.subr.bf16.mxu0 %v2976
    %3263 = vmatpush2.bf16.msra.mxu0 %v2975
    %3264 = vmatprep.subr.bf16.mxu0 %v2972
    %3265 = vmatpush2.bf16.msra.mxu0 %v2971
    %3266 = vmatprep.subr.bf16.mxu0 %v2968
    %3267 = vmatpush2.bf16.msra.mxu0 %v2967
    %3268 = vmatprep.subr.bf16.mxu0 %v2964
    %3269 = vmatpush2.bf16.msra.mxu0 %v2963
    %3270 = vmatprep.subr.bf16.mxu0 %v2960
    %3271 = vmatpush2.bf16.msra.mxu0 %v2959
    %3272 = vmatprep.subr.bf16.mxu0 %v2956
    %3273 = vmatpush2.bf16.msra.mxu0 %v2955
    %3274 = vmatprep.mubr.bf16.mxu0 %v2322
    %3275 = vmatmul.mubr.bf16.gmra.mxu0 %v2321
    %v3276 = vpop.f32.mrf.mxu0
    %v3277 = vadd.f32 %v3234, %v3276
    %v3278 = vpop.f32.mrf.mxu0
    %v3279 = vadd.f32 %v3236, %v3278
    %v3280 = vpop.f32.mrf.mxu0
    %v3281 = vadd.f32 %v3238, %v3280
    %v3282 = vpop.f32.mrf.mxu0
    %v3283 = vadd.f32 %v3240, %v3282
    %3284 = vdwg.mxu0
    %3285 = vst [vmem:[%s7] sm:$0xff] %v3191
    %3286 = vst [vmem:[%s7 + $0x8] sm:$0xff] %v3193
    %3287 = vst [vmem:[%s7 + $0x10] sm:$0xff] %v3277
    %3288 = vst [vmem:[%s7 + $0x18] sm:$0xff] %v3279
    %3289 = vst [vmem:[%s7 + $0x20] sm:$0xff] %v3195
    %3290 = vst [vmem:[%s7 + $0x28] sm:$0xff] %v3197
    %3291 = vst [vmem:[%s7 + $0x30] sm:$0xff] %v3281
    %3292 = vst [vmem:[%s7 + $0x38] sm:$0xff] %v3283
    // Predicated region
    $region42: #{complex_vector_model.1} parent=1 // pred_check
      _
    $region43: #{complex_vector_model.1} parent=1 // pred_check_branch
      %3294 = sbr.rel (0) target = $region45
    $region44: #{complex_vector_model.1} parent=1 // pred_region
      _
    $region45: #{complex_vector_model.1} parent=1 // pred_fallthru
      _
    // Predicated region
    $region46: #{complex_vector_model.1} parent=1 // pred_check
      _
    $region47: #{complex_vector_model.1} parent=1 // pred_check_branch
      %3296 = sbr.rel (0) target = $region49
    $region48: #{complex_vector_model.1} parent=1 // pred_region
      _
    $region49: #{complex_vector_model.1} parent=1 // pred_fallthru
      _
    %3297 = vsyncpa [#allocation3], 1
    %3298 = vsyncpa [#allocation5], 1

</llo_original>
